<compile_context>
chip_gen: v5e
topology: v5e:2x2
jax: 0.10.0
libtpu: 0.0.40
codegen_flags: <defaults>
</compile_context>

<pallas_src>
import functools
import math

import jax
import jax.numpy as jnp
from jax.experimental import pallas as pl
from jax.experimental.pallas import tpu as pltpu

HIDDEN = 512   # conv1_da out-channels from the module definition
_LANE = 128


def _da_img_head_kernel(x_ref, w1t_ref, b1w2_ref, b2_ref, o_ref, *, chunk):
    # x_ref:    (C, tm)   spatial positions on lanes, channels on sublanes (f32)
    # w1t_ref:  (512, C)  conv1_da weight (out-ch x in-ch), pre-cast bf16, resident
    # b1w2_ref: (512, 2)  column 0 = conv1_da bias, column 1 = conv2_da weight (f32)
    # b2_ref:   (1,)      conv2_da bias, SMEM scalar
    # o_ref:    (1, tm)   lane-dense output block
    #
    # Tail blocks (hw % tm != 0) may read undefined lanes past the array end;
    # every op is lane-wise and the reduction runs over sublanes only, and the
    # partial output store is masked, so garbage lanes never contaminate valid
    # output.  Do NOT "fix" this with a host-side pad (extra HBM pass).
    x = x_ref[...].astype(jnp.bfloat16)          # in-VMEM cast; HBM stream untouched
    b1w2 = b1w2_ref[...]                         # (512, 2) f32
    acc = None
    for i in range(HIDDEN // chunk):             # static loop; chunk==HIDDEN => 1 iter
        lo, hi = i * chunk, (i + 1) * chunk
        # First 1x1 conv (row-chunk): bf16 operands on the MXU, f32 accumulation.
        t = jnp.dot(w1t_ref[lo:hi, :], x, preferred_element_type=jnp.float32)
        t = jnp.maximum(t + b1w2[lo:hi, 0:1], 0.0)                 # bias + ReLU (VPU)
        # Second 1x1 conv (512 -> 1): VPU multiply + cross-sublane reduce.
        p = jnp.sum(t * b1w2[lo:hi, 1:2], axis=0, keepdims=True)   # (1, tm)
        acc = p if acc is None else acc + p
    o_ref[...] = (acc + b2_ref[0]).astype(o_ref.dtype)


def _tpu_vmem_capacity_bytes():
    try:
        info = pltpu.get_tpu_info()
        return int(getattr(info, "vmem_capacity_bytes", 128 << 20))
    except Exception:
        return 128 << 20


def _vmem_policy():
    """Generation-aware (working-set budget, spatial-tile cap, scoped-VMEM limit)."""
    cap = _tpu_vmem_capacity_bytes()
    if cap >= (100 << 20):                 # v5e / v6e: 128 MiB physical VMEM
        return 40 << 20, 8192, 96 << 20
    return 26 << 20, 4096, 48 << 20        # v7x: 64 MiB physical VMEM


def _pick_tile(hw, c, chunk, budget_bytes, cap):
    """Largest spatial tile whose per-step working set fits the VMEM budget.

    Working set ~ 2 double-buffered x tiles (C*tm*4B) + (chunk, tm) f32
    intermediate + 2 output buffers (tm*4B each).  Resident bf16 weights and the
    (512, 2) bias/weight block are small and excluded.
    """
    denom = 8 * c + 4 * chunk + 8
    tm = budget_bytes // denom
    tm = max(_LANE, min(cap, (tm // _LANE) * _LANE))
    if hw <= tm:
        return hw          # single full-extent block: always layout-legal
    return tm


def _run_head(x, w1t_bf16, b1w2, b2):
    """x: [N, C, HW] -> [N, 1, HW] via fused 1x1conv / ReLU / 1x1conv."""
    n, c, hw = x.shape
    chunk = 128 if c <= 64 else HIDDEN     # small-K levels: shrink the f32 temp
    budget, cap, vmem_limit = _vmem_policy()
    tm = _pick_tile(hw, c, chunk, budget, cap)
    grid = (n, pl.cdiv(hw, tm))
    kernel = functools.partial(_da_img_head_kernel, chunk=chunk)
    return pl.pallas_call(
        kernel,
        out_shape=jax.ShapeDtypeStruct((n, 1, hw), x.dtype),
        grid_spec=pltpu.PrefetchScalarGridSpec(
            num_scalar_prefetch=0,
            grid=grid,
            in_specs=[
                # batch dim squeezed out; kernel sees (C, tm)
                pl.BlockSpec((None, c, tm), lambda b, m: (b, 0, m)),
                # grid-invariant weights: single-buffered (no double buffer needed)
                pl.BlockSpec((HIDDEN, c), lambda b, m: (0, 0),
                             pipeline_mode=pl.Buffered(1)),
                pl.BlockSpec((HIDDEN, 2), lambda b, m: (0, 0),
                             pipeline_mode=pl.Buffered(1)),
                pl.BlockSpec(memory_space=pltpu.MemorySpace.SMEM),   # b2 scalar
            ],
            out_specs=pl.BlockSpec((None, 1, tm), lambda b, m: (b, 0, m)),
        ),
        compiler_params=pltpu.CompilerParams(
            dimension_semantics=("parallel", "parallel"),
            vmem_limit_bytes=vmem_limit,
        ),
    )(x, w1t_bf16, b1w2, b2)


def da_img_head_forward(features, params):
    """features: list of NCHW arrays.  Returns list of [N, 1, H, W] arrays."""
    w1t, b1, w2, b2 = params
    # One-time operand prep (outside the kernel):
    #  * conv1 weight cast to bf16 once (MXU operand) instead of every grid step
    #  * conv1 bias + conv2 weight merged into a single (512, 2) resident block
    w1t_bf16 = w1t.astype(jnp.bfloat16)
    b1w2 = jnp.concatenate([b1, w2], axis=1)        # (512, 2) f32
    outs = []
    for feat in features:
        n, c, h, w = feat.shape
        x = feat.reshape(n, c, h * w)               # free view, keeps NCHW layout
        o = _run_head(x, w1t_bf16, b1w2, b2)        # [N, 1, H*W]
        outs.append(o.reshape(n, 1, h, w))
    return outs


def init_params(key, in_channels):
    """Deterministic init matching nn.Conv2d defaults, stored in kernel layout.

    Mapping from the PyTorch module:
      w1t [512, C]  == conv1_da.weight[:, :, 0, 0]
      b1  [512, 1]  == conv1_da.bias[:, None]
      w2  [512, 1]  == conv2_da.weight[0, :, 0, 0][:, None]
      b2  [1]       == conv2_da.bias
    """
    k1, k2, k3, k4 = jax.random.split(key, 4)
    bound1 = 1.0 / math.sqrt(in_channels)   # fan_in = in_channels * 1 * 1
    bound2 = 1.0 / math.sqrt(HIDDEN)
    w1t = jax.random.uniform(k1, (HIDDEN, in_channels), jnp.float32, -bound1, bound1)
    b1 = jax.random.uniform(k2, (HIDDEN, 1), jnp.float32, -bound1, bound1)
    w2 = jax.random.uniform(k3, (HIDDEN, 1), jnp.float32, -bound2, bound2)
    b2 = jax.random.uniform(k4, (1,), jnp.float32, -bound2, bound2)
    return w1t, b1, w2, b2


def _reference(features, params):
    """Pure-JAX reference with the same precision policy (bf16 MXU operands,
    f32 accumulation) so the comparison isolates kernel correctness."""
    w1t, b1, w2, b2 = params
    outs = []
    for feat in features:
        n, c, h, w = feat.shape
        x = feat.reshape(n, c, h * w)
        t = jnp.einsum(
            "oc,ncm->nom",
            w1t.astype(jnp.bfloat16),
            x.astype(jnp.bfloat16),
            preferred_element_type=jnp.float32,
        )
        t = jax.nn.relu(t + b1[None, :, :])
        o = jnp.sum(t * w2[None, :, :], axis=1, keepdims=True) + b2[0]
        outs.append(o.reshape(n, 1, h, w))
    return outs


if __name__ == "__main__":
    key = jax.random.PRNGKey(0)
    kp, kx1, kx2 = jax.random.split(key, 3)

    in_channels = 4
    params = init_params(kp, in_channels)

    # DAImgHead takes a *list* of feature maps (NCHW); use two pyramid levels.
    feat1 = jax.random.normal(kx1, (2, in_channels, 16, 16), jnp.float32)
    feat2 = jax.random.normal(kx2, (2, in_channels, 8, 8), jnp.float32)
    features = [feat1, feat2]

    outs = da_img_head_forward(features, params)
    outs = [jax.block_until_ready(o) for o in outs]

    refs = _reference(features, params)
    for o, r in zip(outs, refs):
        assert o.shape == r.shape, (o.shape, r.shape)
        # bf16 matmul operands + differing reduction order -> small tolerance.
        assert jnp.allclose(o, r, atol=2e-3, rtol=2e-3), "mismatch vs reference"

    print("KERNEL_OK")
</pallas_src>

<mosaic_0001>
module attributes {stable_mosaic.version = 11 : i64} {
  func.func @_da_img_head_kernel(%arg0: i32, %arg1: i32, %arg2: memref<1x4x256xf32, #tpu.memory_space<vmem>>, %arg3: memref<512x4xbf16, #tpu.memory_space<vmem>>, %arg4: memref<512x2xf32, #tpu.memory_space<vmem>>, %arg5: memref<1xf32, #tpu.memory_space<smem>>, %arg6: memref<1x1x256xf32, #tpu.memory_space<vmem>>) attributes {dimension_semantics = [#tpu.dimension_semantics<parallel>, #tpu.dimension_semantics<parallel>], iteration_bounds = array<i64: 2, 1>, scalar_prefetch = 0 : i64, scratch_operands = 0 : i64, tpu.core_type = #tpu.core_type<tc>, window_params = [{transform_indices = @transform_0, window_bounds = array<i64: 1, 4, 256>}, {pipeline_mode = #tpu.pipeline_mode<synchronous>, transform_indices = @transform_1, window_bounds = array<i64: 512, 4>}, {pipeline_mode = #tpu.pipeline_mode<synchronous>, transform_indices = @transform_2, window_bounds = array<i64: 512, 2>}, {transform_indices = @transform_3, window_bounds = array<i64: 1>}, {transform_indices = @transform_4, window_bounds = array<i64: 1, 1, 256>}]} {
    %c0 = arith.constant 0 : index
    %c0_0 = arith.constant 0 : index
    %c0_1 = arith.constant 0 : index
    %0 = vector.load %arg2[%c0, %c0_0, %c0_1] : memref<1x4x256xf32, #tpu.memory_space<vmem>>, vector<1x4x256xf32>
    %1 = vector.shape_cast %0 : vector<1x4x256xf32> to vector<4x256xf32>
    %2 = arith.truncf %1 : vector<4x256xf32> to vector<4x256xbf16>
    %c0_2 = arith.constant 0 : index
    %c0_3 = arith.constant 0 : index
    %3 = vector.load %arg4[%c0_2, %c0_3] : memref<512x2xf32, #tpu.memory_space<vmem>>, vector<512x2xf32>
    %c0_4 = arith.constant 0 : index
    %c0_5 = arith.constant 0 : index
    %4 = vector.load %arg3[%c0_4, %c0_5] : memref<512x4xbf16, #tpu.memory_space<vmem>>, vector<128x4xbf16>
    %cst = arith.constant dense<0.000000e+00> : vector<128x256xf32>
    %5 = tpu.matmul %4, %2, %cst {dimension_numbers = #tpu.dot_dimension_numbers<[1], [0], [0], [1], [0, 0, 1, 1], [], []>} : vector<128x4xbf16>, vector<4x256xbf16>, vector<128x256xf32> -> vector<128x256xf32>
    %6 = vector.extract_strided_slice %3 {offsets = [0, 0], sizes = [128, 1], strides = [1, 1]} : vector<512x2xf32> to vector<128x1xf32>
    %7 = vector.broadcast %6 : vector<128x1xf32> to vector<128x256xf32>
    %8 = arith.addf %5, %7 : vector<128x256xf32>
    %cst_6 = arith.constant 0.000000e+00 : f32
    %9 = vector.broadcast %cst_6 : f32 to vector<128x256xf32>
    %10 = arith.maximumf %8, %9 : vector<128x256xf32>
    %11 = vector.extract_strided_slice %3 {offsets = [0, 1], sizes = [128, 1], strides = [1, 1]} : vector<512x2xf32> to vector<128x1xf32>
    %12 = vector.broadcast %11 : vector<128x1xf32> to vector<128x256xf32>
    %13 = arith.mulf %10, %12 : vector<128x256xf32>
    %cst_7 = arith.constant dense<0.000000e+00> : vector<256xf32>
    %14 = vector.multi_reduction <add>, %13, %cst_7 [0] : vector<128x256xf32> to vector<256xf32>
    %15 = vector.shape_cast %14 : vector<256xf32> to vector<1x256xf32>
    %c128 = arith.constant 128 : index
    %c0_8 = arith.constant 0 : index
    %16 = vector.load %arg3[%c128, %c0_8] : memref<512x4xbf16, #tpu.memory_space<vmem>>, vector<128x4xbf16>
    %cst_9 = arith.constant dense<0.000000e+00> : vector<128x256xf32>
    %17 = tpu.matmul %16, %2, %cst_9 {dimension_numbers = #tpu.dot_dimension_numbers<[1], [0], [0], [1], [0, 0, 1, 1], [], []>} : vector<128x4xbf16>, vector<4x256xbf16>, vector<128x256xf32> -> vector<128x256xf32>
    %18 = vector.extract_strided_slice %3 {offsets = [128, 0], sizes = [128, 1], strides = [1, 1]} : vector<512x2xf32> to vector<128x1xf32>
    %19 = vector.broadcast %18 : vector<128x1xf32> to vector<128x256xf32>
    %20 = arith.addf %17, %19 : vector<128x256xf32>
    %cst_10 = arith.constant 0.000000e+00 : f32
    %21 = vector.broadcast %cst_10 : f32 to vector<128x256xf32>
    %22 = arith.maximumf %20, %21 : vector<128x256xf32>
    %23 = vector.extract_strided_slice %3 {offsets = [128, 1], sizes = [128, 1], strides = [1, 1]} : vector<512x2xf32> to vector<128x1xf32>
    %24 = vector.broadcast %23 : vector<128x1xf32> to vector<128x256xf32>
    %25 = arith.mulf %22, %24 : vector<128x256xf32>
    %cst_11 = arith.constant dense<0.000000e+00> : vector<256xf32>
    %26 = vector.multi_reduction <add>, %25, %cst_11 [0] : vector<128x256xf32> to vector<256xf32>
    %27 = vector.shape_cast %26 : vector<256xf32> to vector<1x256xf32>
    %28 = arith.addf %15, %27 : vector<1x256xf32>
    %c256 = arith.constant 256 : index
    %c0_12 = arith.constant 0 : index
    %29 = vector.load %arg3[%c256, %c0_12] : memref<512x4xbf16, #tpu.memory_space<vmem>>, vector<128x4xbf16>
    %cst_13 = arith.constant dense<0.000000e+00> : vector<128x256xf32>
    %30 = tpu.matmul %29, %2, %cst_13 {dimension_numbers = #tpu.dot_dimension_numbers<[1], [0], [0], [1], [0, 0, 1, 1], [], []>} : vector<128x4xbf16>, vector<4x256xbf16>, vector<128x256xf32> -> vector<128x256xf32>
    %31 = vector.extract_strided_slice %3 {offsets = [256, 0], sizes = [128, 1], strides = [1, 1]} : vector<512x2xf32> to vector<128x1xf32>
    %32 = vector.broadcast %31 : vector<128x1xf32> to vector<128x256xf32>
    %33 = arith.addf %30, %32 : vector<128x256xf32>
    %cst_14 = arith.constant 0.000000e+00 : f32
    %34 = vector.broadcast %cst_14 : f32 to vector<128x256xf32>
    %35 = arith.maximumf %33, %34 : vector<128x256xf32>
    %36 = vector.extract_strided_slice %3 {offsets = [256, 1], sizes = [128, 1], strides = [1, 1]} : vector<512x2xf32> to vector<128x1xf32>
    %37 = vector.broadcast %36 : vector<128x1xf32> to vector<128x256xf32>
    %38 = arith.mulf %35, %37 : vector<128x256xf32>
    %cst_15 = arith.constant dense<0.000000e+00> : vector<256xf32>
    %39 = vector.multi_reduction <add>, %38, %cst_15 [0] : vector<128x256xf32> to vector<256xf32>
    %40 = vector.shape_cast %39 : vector<256xf32> to vector<1x256xf32>
    %41 = arith.addf %28, %40 : vector<1x256xf32>
    %c384 = arith.constant 384 : index
    %c0_16 = arith.constant 0 : index
    %42 = vector.load %arg3[%c384, %c0_16] : memref<512x4xbf16, #tpu.memory_space<vmem>>, vector<128x4xbf16>
    %cst_17 = arith.constant dense<0.000000e+00> : vector<128x256xf32>
    %43 = tpu.matmul %42, %2, %cst_17 {dimension_numbers = #tpu.dot_dimension_numbers<[1], [0], [0], [1], [0, 0, 1, 1], [], []>} : vector<128x4xbf16>, vector<4x256xbf16>, vector<128x256xf32> -> vector<128x256xf32>
    %44 = vector.extract_strided_slice %3 {offsets = [384, 0], sizes = [128, 1], strides = [1, 1]} : vector<512x2xf32> to vector<128x1xf32>
    %45 = vector.broadcast %44 : vector<128x1xf32> to vector<128x256xf32>
    %46 = arith.addf %43, %45 : vector<128x256xf32>
    %cst_18 = arith.constant 0.000000e+00 : f32
    %47 = vector.broadcast %cst_18 : f32 to vector<128x256xf32>
    %48 = arith.maximumf %46, %47 : vector<128x256xf32>
    %49 = vector.extract_strided_slice %3 {offsets = [384, 1], sizes = [128, 1], strides = [1, 1]} : vector<512x2xf32> to vector<128x1xf32>
    %50 = vector.broadcast %49 : vector<128x1xf32> to vector<128x256xf32>
    %51 = arith.mulf %48, %50 : vector<128x256xf32>
    %cst_19 = arith.constant dense<0.000000e+00> : vector<256xf32>
    %52 = vector.multi_reduction <add>, %51, %cst_19 [0] : vector<128x256xf32> to vector<256xf32>
    %53 = vector.shape_cast %52 : vector<256xf32> to vector<1x256xf32>
    %54 = arith.addf %41, %53 : vector<1x256xf32>
    %c0_20 = arith.constant 0 : index
    %55 = memref.load %arg5[%c0_20] : memref<1xf32, #tpu.memory_space<smem>>
    %56 = vector.broadcast %55 : f32 to vector<1x256xf32>
    %57 = arith.addf %54, %56 : vector<1x256xf32>
    %c0_21 = arith.constant 0 : index
    %c0_22 = arith.constant 0 : index
    %c0_23 = arith.constant 0 : index
    %58 = vector.load %arg6[%c0_21, %c0_22, %c0_23] : memref<1x1x256xf32, #tpu.memory_space<vmem>>, vector<1x1x256xf32>
    %59 = vector.shape_cast %58 : vector<1x1x256xf32> to vector<1x256xf32>
    %60 = vector.shape_cast %57 : vector<1x256xf32> to vector<1x1x256xf32>
    tpu.vector_store %arg6[%c0_21, %c0_22, %c0_23], %60 {strides = array<i32>} : memref<1x1x256xf32, #tpu.memory_space<vmem>>, vector<1x1x256xf32>,
    return
  }
  func.func @transform_0(%arg0: i32, %arg1: i32) -> (i32, i32, i32) {
    %c0_i32 = arith.constant 0 : i32
    %c0_i32_0 = arith.constant 0 : i32
    return %arg0, %c0_i32, %arg1 : i32, i32, i32
  }
  func.func @transform_1(%arg0: i32, %arg1: i32) -> (i32, i32) {
    %c0_i32 = arith.constant 0 : i32
    %c0_i32_0 = arith.constant 0 : i32
    %c0_i32_1 = arith.constant 0 : i32
    return %c0_i32, %c0_i32_0 : i32, i32
  }
  func.func @transform_2(%arg0: i32, %arg1: i32) -> (i32, i32) {
    %c0_i32 = arith.constant 0 : i32
    %c0_i32_0 = arith.constant 0 : i32
    %c0_i32_1 = arith.constant 0 : i32
    return %c0_i32, %c0_i32_0 : i32, i32
  }
  func.func @transform_3(%arg0: i32, %arg1: i32) -> i32 {
    %c0_i32 = arith.constant 0 : i32
    %c0_i32_0 = arith.constant 0 : i32
    return %c0_i32 : i32
  }
  func.func @transform_4(%arg0: i32, %arg1: i32) -> (i32, i32, i32) {
    %c0_i32 = arith.constant 0 : i32
    %c0_i32_0 = arith.constant 0 : i32
    return %arg0, %c0_i32, %arg1 : i32, i32, i32
  }
}

</mosaic_0001>

<llo_original>
// kernel: tpu_custom_call.1
$region0: #{tpu_custom_call.1}
  #allocation0 [shape = 'u32[]', space=smem, size = 0x4, offset = 0x4, fixed_abs, tag = 'smem constant byte address 0x4 - core index']
  #allocation1 [shape = 'u32[72,128]{1,0:T(1,128)}', space=vmem, size = 0x9000, scoped, tag = 'internal scratch']
  #allocation2 [shape = 'f32[1]{0:T(128)S(6)}', space=smem, size = 0x200, scoped, tag = 'scoped memory for tpu_custom_call.1']
  %s0 = inlined_call_operand.vmem [shape: f32[2,4,256], index: 0, kind: input, shape index: {}]
  %s1 = inlined_call_operand.vmem [shape: bf16[512,4], index: 1, kind: input, shape index: {}]
  %s2 = inlined_call_operand.vmem [shape: f32[512,2], index: 2, kind: input, shape index: {}]
  %s3 = inlined_call_operand.<no memory space> [shape: f32[1], index: 3, kind: input, shape index: {}]
  %s4 = inlined_call_operand.hbm [shape: f32[2,1,256], index: 4, kind: output, shape index: {}]
  %s5 = sld [smem:[#allocation0]]
  $region49: #{tpu_custom_call.1} parent=0
    _
  %s7 = ssub.s32 1, %s5
  %s8 = scalar_select 0, %s7, %s5
  %9 = sst [smem:[#allocation2]] %s3
  $region1: #{tpu_custom_call.1} parent=0
    #allocation3 [shape = 'u8[2048]{0}', space=vmem, size = 0x800, scoped, tag = 'output window, operand 0']
    #allocation4 [shape = 's32[2]{0}', space=sflag, size = 0x8, scoped, tag = 'scoped memory for tpu_custom_call.1']
    %10 = vsyncpa [#allocation4], 0
    %s11 = scalar_lea.sflag [#allocation4], 1
    %12 = vsyncpa %s11, 0
    loop: start=0, step=1, limit=4
    $region2: #{tpu_custom_call.1} parent=1 // loop_pre_header
      _
    $region3: #{tpu_custom_call.1} parent=1 // loop_header
      %s14 = sphi 0, %s18
      %p15 = scmp.ge.s32.totalorder %s14, 4
      %s21 = sphi 0, %s33
      %s22 = sphi 0, %s29
      %s23 = sphi 0, %s21
      %s24 = sphi 0, %s22
      %s25 = sphi 0, %s23
      %s26 = sphi 0, %s24
      %s38 = sphi 0, %s40
      %s41 = sphi 0, %s38
      %s42 = sphi 0, %s41
      %s58 = sphi 0, %s42
      %s62 = sphi 0, %s62
      %s64 = sphi 0, %s62
      %s65 = sphi 0, %s64
      %s79 = sphi 0, %s65
      %s83 = sphi 0, %s83
      %s85 = sphi 0, %s83
      %s86 = sphi 0, %s85
      %s100 = sphi 0, %s86
      %s104 = sphi 0, %s104
      %s106 = sphi 0, %s104
      %s107 = sphi 0, %s106
      %s121 = sphi 0, %s107
      %s129 = sphi 0, %s131
      %s132 = sphi 0, %s129
      %s133 = sphi 0, %s132
      %s149 = sphi 0, %s133
    $region4: #{tpu_custom_call.1} parent=1 // loop_header_branch
      %17 = sbr.rel (%p15) target = $region8
    $region5: #{tpu_custom_call.1} parent=1 // loop_body
      %s19 = ssub.s32 %s14, 1
      %s20 = ssub.s32 %s14, 2
      %s27 = sadd.s32 1, %s22
      %p28 = scmp.ge.s32.totalorder %s27, 1
      %s29 = scalar_select %p28, 0, %s27
      %s30 = sadd.s32 1, %s21
      %s31 = scalar_select %p28, %s30, %s21
      %p32 = scmp.ge.s32.totalorder %s31, 2
      %s33 = scalar_select %p32, 0, %s31
      %s34 = ssub.s32 %s21, %s33
      %s35 = ssub.s32 %s22, %s29
      %s36 = sor.u32 %s34, %s35
      %p37 = scmp.eq.s32.totalorder %s36, 0
      %s39 = sadd.s32 %s38, 1
      %s40 = scalar_select %p37, %s38, %s39
      %p43 = pneg %p37
      %p44 = scmp.eq.s32.totalorder %s14, 1
      %p45 = por %p43, %p44
      %p46 = scmp.ne.s32.totalorder %s38, %s41
      %p47 = scmp.eq.s32.totalorder %s14, 0
      %p48 = por %p46, %p47
      %p49 = scmp.ne.s32.totalorder %s38, %s41
      %p50 = scmp.eq.s32.totalorder %s19, 1
      %p51 = por %p49, %p50
      %p52 = scmp.ne.s32.totalorder %s41, %s42
      %p53 = scmp.eq.s32.totalorder %s19, 0
      %p54 = por %p52, %p53
      %p55 = scmp.ne.s32.totalorder %s41, %s42
      %p56 = scmp.eq.s32.totalorder %s20, 1
      %p57 = por %p55, %p56
      %p59 = scmp.ne.s32.totalorder %s42, %s58
      %p60 = scmp.eq.s32.totalorder %s20, 0
      %p61 = por %p59, %p60
      %s63 = sadd.s32 %s62, 1
      %p66 = scmp.eq.s32.totalorder %s14, 1
      %p67 = scmp.ne.s32.totalorder %s62, %s64
      %p68 = scmp.eq.s32.totalorder %s14, 0
      %p69 = por %p67, %p68
      %p70 = scmp.ne.s32.totalorder %s62, %s64
      %p71 = scmp.eq.s32.totalorder %s19, 1
      %p72 = por %p70, %p71
      %p73 = scmp.ne.s32.totalorder %s64, %s65
      %p74 = scmp.eq.s32.totalorder %s19, 0
      %p75 = por %p73, %p74
      %p76 = scmp.ne.s32.totalorder %s64, %s65
      %p77 = scmp.eq.s32.totalorder %s20, 1
      %p78 = por %p76, %p77
      %p80 = scmp.ne.s32.totalorder %s65, %s79
      %p81 = scmp.eq.s32.totalorder %s20, 0
      %p82 = por %p80, %p81
      %s84 = sadd.s32 %s83, 1
      %p87 = scmp.eq.s32.totalorder %s14, 1
      %p88 = scmp.ne.s32.totalorder %s83, %s85
      %p89 = scmp.eq.s32.totalorder %s14, 0
      %p90 = por %p88, %p89
      %p91 = scmp.ne.s32.totalorder %s83, %s85
      %p92 = scmp.eq.s32.totalorder %s19, 1
      %p93 = por %p91, %p92
      %p94 = scmp.ne.s32.totalorder %s85, %s86
      %p95 = scmp.eq.s32.totalorder %s19, 0
      %p96 = por %p94, %p95
      %p97 = scmp.ne.s32.totalorder %s85, %s86
      %p98 = scmp.eq.s32.totalorder %s20, 1
      %p99 = por %p97, %p98
      %p101 = scmp.ne.s32.totalorder %s86, %s100
      %p102 = scmp.eq.s32.totalorder %s20, 0
      %p103 = por %p101, %p102
      %s105 = sadd.s32 %s104, 1
      %p108 = scmp.eq.s32.totalorder %s14, 1
      %p109 = scmp.ne.s32.totalorder %s104, %s106
      %p110 = scmp.eq.s32.totalorder %s14, 0
      %p111 = por %p109, %p110
      %p112 = scmp.ne.s32.totalorder %s104, %s106
      %p113 = scmp.eq.s32.totalorder %s19, 1
      %p114 = por %p112, %p113
      %p115 = scmp.ne.s32.totalorder %s106, %s107
      %p116 = scmp.eq.s32.totalorder %s19, 0
      %p117 = por %p115, %p116
      %p118 = scmp.ne.s32.totalorder %s106, %s107
      %p119 = scmp.eq.s32.totalorder %s20, 1
      %p120 = por %p118, %p119
      %p122 = scmp.ne.s32.totalorder %s107, %s121
      %p123 = scmp.eq.s32.totalorder %s20, 0
      %p124 = por %p122, %p123
      %s125 = ssub.s32 %s21, %s33
      %s126 = ssub.s32 %s22, %s29
      %s127 = sor.u32 %s125, %s126
      %p128 = scmp.eq.s32.totalorder %s127, 0
      %s130 = sadd.s32 %s129, 1
      %s131 = scalar_select %p128, %s129, %s130
      %p134 = pneg %p128
      %p135 = scmp.eq.s32.totalorder %s14, 1
      %p136 = por %p134, %p135
      %p137 = scmp.ne.s32.totalorder %s129, %s132
      %p138 = scmp.eq.s32.totalorder %s14, 0
      %p139 = por %p137, %p138
      %p140 = scmp.ne.s32.totalorder %s129, %s132
      %p141 = scmp.eq.s32.totalorder %s19, 1
      %p142 = por %p140, %p141
      %p143 = scmp.ne.s32.totalorder %s132, %s133
      %p144 = scmp.eq.s32.totalorder %s19, 0
      %p145 = por %p143, %p144
      %p146 = scmp.ne.s32.totalorder %s132, %s133
      %p147 = scmp.eq.s32.totalorder %s20, 1
      %p148 = por %p146, %p147
      %p150 = scmp.ne.s32.totalorder %s133, %s149
      %p151 = scmp.eq.s32.totalorder %s20, 0
      %p152 = por %p150, %p151
      %p153 = scmp.le.s32.totalorder 1, %s14
      %p154 = scmp.lt.s32.totalorder %s14, 3
      %p155 = pnand %p153, %p154
      %p156 = pneg %p155
      // Predicated region
      $region9: #{tpu_custom_call.1} parent=5 // pred_check
        _
      $region10: #{tpu_custom_call.1} parent=5 // pred_check_branch
        %158 = sbr.rel (%p155) target = $region12
      $region11: #{tpu_custom_call.1} parent=5 // pred_region
        %s159 = ssub.s32 %s14, 1
        // Predicated region
        $region13: #{tpu_custom_call.1} parent=11 // pred_check
          %p160 = pneg %p75
        $region14: #{tpu_custom_call.1} parent=11 // pred_check_branch
          %162 = sbr.rel (%p160) target = $region16
        $region15: #{tpu_custom_call.1} parent=11 // pred_region
          _
        $region16: #{tpu_custom_call.1} parent=11 // pred_fallthru
          _
        // Predicated region
        $region17: #{tpu_custom_call.1} parent=11 // pred_check
          %p163 = pneg %p96
        $region18: #{tpu_custom_call.1} parent=11 // pred_check_branch
          %165 = sbr.rel (%p163) target = $region20
        $region19: #{tpu_custom_call.1} parent=11 // pred_region
          _
        $region20: #{tpu_custom_call.1} parent=11 // pred_fallthru
          _
        // Predicated region
        $region21: #{tpu_custom_call.1} parent=11 // pred_check
          %p166 = pneg %p117
        $region22: #{tpu_custom_call.1} parent=11 // pred_check_branch
          %168 = sbr.rel (%p166) target = $region24
        $region23: #{tpu_custom_call.1} parent=11 // pred_region
          _
        $region24: #{tpu_custom_call.1} parent=11 // pred_fallthru
          _
      $region12: #{tpu_custom_call.1} parent=5 // pred_fallthru
        _
      %p169 = scmp.lt.s32.totalorder %s14, 2
      // Predicated region
      $region25: #{tpu_custom_call.1} parent=5 // pred_check
        %p170 = pneg %p169
      $region26: #{tpu_custom_call.1} parent=5 // pred_check_branch
        %172 = sbr.rel (%p170) target = $region28
      $region27: #{tpu_custom_call.1} parent=5 // pred_region
        // Predicated region
        $region29: #{tpu_custom_call.1} parent=27 // pred_check
          %p173 = pneg %p48
        $region30: #{tpu_custom_call.1} parent=27 // pred_check_branch
          %175 = sbr.rel (%p173) target = $region32
        $region31: #{tpu_custom_call.1} parent=27 // pred_region
          %s176 = smul.u32 2, %s22
          %p177 = scmp.lt.s32.totalorder %s21, 1
          %s178 = scalar_select %p177, %s21, 1
          %p179 = scmp.lt.s32.totalorder %s176, 1
          %s180 = scalar_select %p179, %s176, 1
          %s181 = smul.addr %s178, 2
          %s182 = sadd.s32 %s180, %s181
          %s183 = smul.addr %s182, 4
          %s184 = scalar_lea.vmem %s0, %s183
          %s185 = smul.u32 2, %s22
        $region32: #{tpu_custom_call.1} parent=27 // pred_fallthru
          _
      $region28: #{tpu_custom_call.1} parent=5 // pred_fallthru
        _
      %p186 = scmp.le.s32.totalorder 1, %s14
      %p187 = scmp.lt.s32.totalorder %s14, 3
      %p188 = pnand %p186, %p187
      %p189 = pneg %p188
      // Predicated region
      $region33: #{tpu_custom_call.1} parent=5 // pred_check
        _
      $region34: #{tpu_custom_call.1} parent=5 // pred_check_branch
        %191 = sbr.rel (%p188) target = $region36
      $region35: #{tpu_custom_call.1} parent=5 // pred_region
        %s192 = ssub.s32 %s14, 1
        %s193 = smul.u32 2, %s24
        %p194 = scmp.lt.s32.totalorder %s23, 1
        %s195 = scalar_select %p194, %s23, 1
        %p196 = scmp.lt.s32.totalorder %s193, 1
        %s197 = scalar_select %p196, %s193, 1
        %s198 = smul.addr %s195, 2
        %s199 = sadd.s32 %s197, %s198
        %s200 = smul.addr %s199, 4
        %s201 = scalar_lea.vmem %s0, %s200
        %p202 = pneg %p54
        %p203 = pneg %p51
        %p204 = pneg %p75
        %p205 = pneg %p72
        %p206 = pneg %p96
        %p207 = pneg %p93
        %p208 = pneg %p117
        %p209 = pneg %p114
        %p210 = pneg %p145
        %p211 = pneg %p142
        %s212 = sand.u32 %s132, 1
        %s213 = scalar_lea.sflag [#allocation4], %s212
        %s214 = sand.u32 %s132, 1
        %s215 = smul.addr %s214, 2
        %s216 = scalar_lea.vmem [#allocation3], %s215
        %s217 = smul.u32 2, %s24
        %p218 = scmp.lt.s32.totalorder %s23, 1
        %s219 = scalar_select %p218, %s23, 1
        %p220 = scmp.lt.s32.totalorder %s217, 1
        %s221 = scalar_select %p220, %s217, 1
        %s222 = smul.addr %s219, 2
        %s223 = sadd.s32 %s221, %s222
        %s224 = smul.addr %s223, 4
        %s225 = scalar_lea.vmem %s0, %s224
        %s226 = smul.u32 2, %s24
        %s227 = smul.u32 2, %s24
        %v229 = vld [vmem:[%s225] sm:$0xff]
        %231 = vst [vmem:[#allocation1] ss:$2 sm:$0xff] %v229
        %v232 = vld.sshfl [vmem:[#allocation1] sm:$0xff pattern:$0x75316420]
        %v233 = vld.sshfl [vmem:[#allocation1 + $0x8] sm:$0xff pattern:$0x75316420]
        %v236 = vpack.c.bf16 %v232, %v232
        %v237 = vpack.c.bf16 %v233, %v233
        %v238 = vld [vmem:[%s2] sm:$0xff]
        %v239 = vld [vmem:[%s2 + $0x8] sm:$0xff]
        %v240 = vld [vmem:[%s2 + $0x10] sm:$0xff]
        %v241 = vld [vmem:[%s2 + $0x18] sm:$0xff]
        %v242 = vld [vmem:[%s2 + $0x20] sm:$0xff]
        %v243 = vld [vmem:[%s2 + $0x28] sm:$0xff]
        %v244 = vld [vmem:[%s2 + $0x30] sm:$0xff]
        %v245 = vld [vmem:[%s2 + $0x38] sm:$0xff]
        %v246 = vld [vmem:[%s2 + $0x40] sm:$0xff]
        %v247 = vld [vmem:[%s2 + $0x48] sm:$0xff]
        %v248 = vld [vmem:[%s2 + $0x50] sm:$0xff]
        %v249 = vld [vmem:[%s2 + $0x58] sm:$0xff]
        %v250 = vld [vmem:[%s2 + $0x60] sm:$0xff]
        %v251 = vld [vmem:[%s2 + $0x68] sm:$0xff]
        %v252 = vld [vmem:[%s2 + $0x70] sm:$0xff]
        %v253 = vld [vmem:[%s2 + $0x78] sm:$0xff]
        %v254 = vld [vmem:[%s2 + $0x80] sm:$0xff]
        %v255 = vld [vmem:[%s2 + $0x88] sm:$0xff]
        %v256 = vld [vmem:[%s2 + $0x90] sm:$0xff]
        %v257 = vld [vmem:[%s2 + $0x98] sm:$0xff]
        %v258 = vld [vmem:[%s2 + $0xa0] sm:$0xff]
        %v259 = vld [vmem:[%s2 + $0xa8] sm:$0xff]
        %v260 = vld [vmem:[%s2 + $0xb0] sm:$0xff]
        %v261 = vld [vmem:[%s2 + $0xb8] sm:$0xff]
        %v262 = vld [vmem:[%s2 + $0xc0] sm:$0xff]
        %v263 = vld [vmem:[%s2 + $0xc8] sm:$0xff]
        %v264 = vld [vmem:[%s2 + $0xd0] sm:$0xff]
        %v265 = vld [vmem:[%s2 + $0xd8] sm:$0xff]
        %v266 = vld [vmem:[%s2 + $0xe0] sm:$0xff]
        %v267 = vld [vmem:[%s2 + $0xe8] sm:$0xff]
        %v268 = vld [vmem:[%s2 + $0xf0] sm:$0xff]
        %v269 = vld [vmem:[%s2 + $0xf8] sm:$0xff]
        %v270 = vld [vmem:[%s2 + $0x100] sm:$0xff]
        %v271 = vld [vmem:[%s2 + $0x108] sm:$0xff]
        %v272 = vld [vmem:[%s2 + $0x110] sm:$0xff]
        %v273 = vld [vmem:[%s2 + $0x118] sm:$0xff]
        %v274 = vld [vmem:[%s2 + $0x120] sm:$0xff]
        %v275 = vld [vmem:[%s2 + $0x128] sm:$0xff]
        %v276 = vld [vmem:[%s2 + $0x130] sm:$0xff]
        %v277 = vld [vmem:[%s2 + $0x138] sm:$0xff]
        %v278 = vld [vmem:[%s2 + $0x140] sm:$0xff]
        %v279 = vld [vmem:[%s2 + $0x148] sm:$0xff]
        %v280 = vld [vmem:[%s2 + $0x150] sm:$0xff]
        %v281 = vld [vmem:[%s2 + $0x158] sm:$0xff]
        %v282 = vld [vmem:[%s2 + $0x160] sm:$0xff]
        %v283 = vld [vmem:[%s2 + $0x168] sm:$0xff]
        %v284 = vld [vmem:[%s2 + $0x170] sm:$0xff]
        %v285 = vld [vmem:[%s2 + $0x178] sm:$0xff]
        %v286 = vld [vmem:[%s2 + $0x180] sm:$0xff]
        %v287 = vld [vmem:[%s2 + $0x188] sm:$0xff]
        %v288 = vld [vmem:[%s2 + $0x190] sm:$0xff]
        %v289 = vld [vmem:[%s2 + $0x198] sm:$0xff]
        %v290 = vld [vmem:[%s2 + $0x1a0] sm:$0xff]
        %v291 = vld [vmem:[%s2 + $0x1a8] sm:$0xff]
        %v292 = vld [vmem:[%s2 + $0x1b0] sm:$0xff]
        %v293 = vld [vmem:[%s2 + $0x1b8] sm:$0xff]
        %v294 = vld [vmem:[%s2 + $0x1c0] sm:$0xff]
        %v295 = vld [vmem:[%s2 + $0x1c8] sm:$0xff]
        %v296 = vld [vmem:[%s2 + $0x1d0] sm:$0xff]
        %v297 = vld [vmem:[%s2 + $0x1d8] sm:$0xff]
        %v298 = vld [vmem:[%s2 + $0x1e0] sm:$0xff]
        %v299 = vld [vmem:[%s2 + $0x1e8] sm:$0xff]
        %v300 = vld [vmem:[%s2 + $0x1f0] sm:$0xff]
        %v301 = vld [vmem:[%s2 + $0x1f8] sm:$0xff]
        %v302 = vld [vmem:[%s1] sm:$0xf]
        %v303 = vld [vmem:[%s1 + $0x4] sm:$0xf]
        %v304 = vld [vmem:[%s1 + $0x8] sm:$0xf]
        %v305 = vld [vmem:[%s1 + $0xc] sm:$0xf]
        %v306 = vld [vmem:[%s1 + $0x10] sm:$0xf]
        %v307 = vld [vmem:[%s1 + $0x14] sm:$0xf]
        %v308 = vld [vmem:[%s1 + $0x18] sm:$0xf]
        %v309 = vld [vmem:[%s1 + $0x1c] sm:$0xf]
        %v310 = vld [vmem:[%s1 + $0x20] sm:$0xf]
        %v311 = vld [vmem:[%s1 + $0x24] sm:$0xf]
        %v312 = vld [vmem:[%s1 + $0x28] sm:$0xf]
        %v313 = vld [vmem:[%s1 + $0x2c] sm:$0xf]
        %v314 = vld [vmem:[%s1 + $0x30] sm:$0xf]
        %v315 = vld [vmem:[%s1 + $0x34] sm:$0xf]
        %v316 = vld [vmem:[%s1 + $0x38] sm:$0xf]
        %v317 = vld [vmem:[%s1 + $0x3c] sm:$0xf]
        %319 = vset.pattern.permute.xlu0 0
        %320 = vperm.xlu0 %319, %v238
        %v321 = vpop.permute.xlu0 %320
        %324 = vset.pattern.permute.xlu0 0
        %325 = vperm.xlu0 %324, %v239
        %v326 = vpop.permute.xlu0 %325
        %329 = vset.pattern.permute.xlu0 0
        %330 = vperm.xlu0 %329, %v240
        %v331 = vpop.permute.xlu0 %330
        %334 = vset.pattern.permute.xlu0 0
        %335 = vperm.xlu0 %334, %v241
        %v336 = vpop.permute.xlu0 %335
        %339 = vset.pattern.permute.xlu0 0
        %340 = vperm.xlu0 %339, %v242
        %v341 = vpop.permute.xlu0 %340
        %344 = vset.pattern.permute.xlu0 0
        %345 = vperm.xlu0 %344, %v243
        %v346 = vpop.permute.xlu0 %345
        %349 = vset.pattern.permute.xlu0 0
        %350 = vperm.xlu0 %349, %v244
        %v351 = vpop.permute.xlu0 %350
        %354 = vset.pattern.permute.xlu0 0
        %355 = vperm.xlu0 %354, %v245
        %v356 = vpop.permute.xlu0 %355
        %359 = vset.pattern.permute.xlu0 0
        %360 = vperm.xlu0 %359, %v246
        %v361 = vpop.permute.xlu0 %360
        %364 = vset.pattern.permute.xlu0 0
        %365 = vperm.xlu0 %364, %v247
        %v366 = vpop.permute.xlu0 %365
        %369 = vset.pattern.permute.xlu0 0
        %370 = vperm.xlu0 %369, %v248
        %v371 = vpop.permute.xlu0 %370
        %374 = vset.pattern.permute.xlu0 0
        %375 = vperm.xlu0 %374, %v249
        %v376 = vpop.permute.xlu0 %375
        %379 = vset.pattern.permute.xlu0 0
        %380 = vperm.xlu0 %379, %v250
        %v381 = vpop.permute.xlu0 %380
        %384 = vset.pattern.permute.xlu0 0
        %385 = vperm.xlu0 %384, %v251
        %v386 = vpop.permute.xlu0 %385
        %389 = vset.pattern.permute.xlu0 0
        %390 = vperm.xlu0 %389, %v252
        %v391 = vpop.permute.xlu0 %390
        %394 = vset.pattern.permute.xlu0 0
        %395 = vperm.xlu0 %394, %v253
        %v396 = vpop.permute.xlu0 %395
        %v414 = vunpack.c.l.b16 %v302
        %v415 = vunpack.c.l.b16 %v303
        %v416 = vunpack.c.l.b16 %v304
        %v417 = vunpack.c.l.b16 %v305
        %v418 = vunpack.c.l.b16 %v306
        %v419 = vunpack.c.l.b16 %v307
        %v420 = vunpack.c.l.b16 %v308
        %v421 = vunpack.c.l.b16 %v309
        %v422 = vunpack.c.l.b16 %v310
        %v423 = vunpack.c.l.b16 %v311
        %v424 = vunpack.c.l.b16 %v312
        %v425 = vunpack.c.l.b16 %v313
        %v426 = vunpack.c.l.b16 %v314
        %v427 = vunpack.c.l.b16 %v315
        %v428 = vunpack.c.l.b16 %v316
        %v429 = vunpack.c.l.b16 %v317
        %v430 = vpack.c.b16 %v415, %v414
        %v431 = vpack.c.b16 %v417, %v416
        %v432 = vpack.c.b16 %v419, %v418
        %v433 = vpack.c.b16 %v421, %v420
        %v434 = vpack.c.b16 %v423, %v422
        %v435 = vpack.c.b16 %v425, %v424
        %v436 = vpack.c.b16 %v427, %v426
        %v437 = vpack.c.b16 %v429, %v428
        %vm438 = vcmask 31744
        %v440 = vsel %vm438, %v430, 0
        %v443 = vsel %vm438, %v431, 0
        %v446 = vsel %vm438, %v432, 0
        %v449 = vsel %vm438, %v433, 0
        %v452 = vsel %vm438, %v434, 0
        %v455 = vsel %vm438, %v435, 0
        %v458 = vsel %vm438, %v436, 0
        %v461 = vsel %vm438, %v437, 0
        %vm463 = vcmask 1041408
        %v465 = vsel %vm463, %v236, 0
        %v468 = vsel %vm463, %v237, 0
        %470 = vmatpush.bf16.msra.mxu0 0
        %471 = vmatpush.bf16.msra.mxu0 0
        %472 = vmatpush.bf16.msra.mxu0 0
        %473 = vmatpush.bf16.msra.mxu0 0
        %474 = vmatpush.bf16.msra.mxu0 0
        %475 = vmatpush.bf16.msra.mxu0 0
        %476 = vmatpush.bf16.msra.mxu0 0
        %477 = vmatpush.bf16.msra.mxu0 %v465
        %478 = vmatmul.bf16.gmra.mxu0 %v440
        %v479 = vpop.f32.mrf.mxu0
        %v480 = vadd.f32 %v321, %v479
        %v481 = vpop.f32.mrf.mxu0
        %v482 = vadd.f32 %v326, %v481
        %483 = vmatmul.bf16.gmra.mxu0 %v443
        %v484 = vpop.f32.mrf.mxu0
        %v485 = vadd.f32 %v331, %v484
        %v486 = vpop.f32.mrf.mxu0
        %v487 = vadd.f32 %v336, %v486
        %488 = vmatmul.bf16.gmra.mxu0 %v446
        %v489 = vpop.f32.mrf.mxu0
        %v490 = vadd.f32 %v341, %v489
        %v491 = vpop.f32.mrf.mxu0
        %v492 = vadd.f32 %v346, %v491
        %493 = vmatmul.bf16.gmra.mxu0 %v449
        %v494 = vpop.f32.mrf.mxu0
        %v495 = vadd.f32 %v351, %v494
        %v496 = vpop.f32.mrf.mxu0
        %v497 = vadd.f32 %v356, %v496
        %498 = vmatmul.bf16.gmra.mxu0 %v452
        %v499 = vpop.f32.mrf.mxu0
        %v500 = vadd.f32 %v361, %v499
        %v501 = vpop.f32.mrf.mxu0
        %v502 = vadd.f32 %v366, %v501
        %503 = vmatmul.bf16.gmra.mxu0 %v455
        %v504 = vpop.f32.mrf.mxu0
        %v505 = vadd.f32 %v371, %v504
        %v506 = vpop.f32.mrf.mxu0
        %v507 = vadd.f32 %v376, %v506
        %508 = vmatmul.bf16.gmra.mxu0 %v458
        %v509 = vpop.f32.mrf.mxu0
        %v510 = vadd.f32 %v381, %v509
        %v511 = vpop.f32.mrf.mxu0
        %v512 = vadd.f32 %v386, %v511
        %513 = vmatmul.bf16.gmra.mxu0 %v461
        %v514 = vpop.f32.mrf.mxu0
        %v515 = vadd.f32 %v391, %v514
        %v516 = vpop.f32.mrf.mxu0
        %v517 = vadd.f32 %v396, %v516
        %518 = vdwg.mxu0
        %519 = vmatpush.bf16.msra.mxu0 0
        %520 = vmatpush.bf16.msra.mxu0 0
        %521 = vmatpush.bf16.msra.mxu0 0
        %522 = vmatpush.bf16.msra.mxu0 0
        %523 = vmatpush.bf16.msra.mxu0 0
        %524 = vmatpush.bf16.msra.mxu0 0
        %525 = vmatpush.bf16.msra.mxu0 0
        %526 = vmatpush.bf16.msra.mxu0 %v468
        %527 = vmatmul.bf16.gmra.mxu0 %v440
        %v528 = vpop.f32.mrf.mxu0
        %v529 = vadd.f32 %v321, %v528
        %v530 = vpop.f32.mrf.mxu0
        %v531 = vadd.f32 %v326, %v530
        %532 = vmatmul.bf16.gmra.mxu0 %v443
        %v533 = vpop.f32.mrf.mxu0
        %v534 = vadd.f32 %v331, %v533
        %v535 = vpop.f32.mrf.mxu0
        %v536 = vadd.f32 %v336, %v535
        %537 = vmatmul.bf16.gmra.mxu0 %v446
        %v538 = vpop.f32.mrf.mxu0
        %v539 = vadd.f32 %v341, %v538
        %v540 = vpop.f32.mrf.mxu0
        %v541 = vadd.f32 %v346, %v540
        %542 = vmatmul.bf16.gmra.mxu0 %v449
        %v543 = vpop.f32.mrf.mxu0
        %v544 = vadd.f32 %v351, %v543
        %v545 = vpop.f32.mrf.mxu0
        %v546 = vadd.f32 %v356, %v545
        %547 = vmatmul.bf16.gmra.mxu0 %v452
        %v548 = vpop.f32.mrf.mxu0
        %v549 = vadd.f32 %v361, %v548
        %v550 = vpop.f32.mrf.mxu0
        %v551 = vadd.f32 %v366, %v550
        %552 = vmatmul.bf16.gmra.mxu0 %v455
        %v553 = vpop.f32.mrf.mxu0
        %v554 = vadd.f32 %v371, %v553
        %v555 = vpop.f32.mrf.mxu0
        %v556 = vadd.f32 %v376, %v555
        %557 = vmatmul.bf16.gmra.mxu0 %v458
        %v558 = vpop.f32.mrf.mxu0
        %v559 = vadd.f32 %v381, %v558
        %v560 = vpop.f32.mrf.mxu0
        %v561 = vadd.f32 %v386, %v560
        %562 = vmatmul.bf16.gmra.mxu0 %v461
        %v563 = vpop.f32.mrf.mxu0
        %v564 = vadd.f32 %v391, %v563
        %v565 = vpop.f32.mrf.mxu0
        %v566 = vadd.f32 %v396, %v565
        %567 = vdwg.mxu0
        %v568 = vmax.f32 %v480, 0.0
        %v569 = vmax.f32 %v529, 0.0
        %v570 = vmax.f32 %v482, 0.0
        %v571 = vmax.f32 %v531, 0.0
        %v572 = vmax.f32 %v485, 0.0
        %v573 = vmax.f32 %v534, 0.0
        %v574 = vmax.f32 %v487, 0.0
        %v575 = vmax.f32 %v536, 0.0
        %v576 = vmax.f32 %v490, 0.0
        %v577 = vmax.f32 %v539, 0.0
        %v578 = vmax.f32 %v492, 0.0
        %v579 = vmax.f32 %v541, 0.0
        %v580 = vmax.f32 %v495, 0.0
        %v581 = vmax.f32 %v544, 0.0
        %v582 = vmax.f32 %v497, 0.0
        %v583 = vmax.f32 %v546, 0.0
        %v584 = vmax.f32 %v500, 0.0
        %v585 = vmax.f32 %v549, 0.0
        %v586 = vmax.f32 %v502, 0.0
        %v587 = vmax.f32 %v551, 0.0
        %v588 = vmax.f32 %v505, 0.0
        %v589 = vmax.f32 %v554, 0.0
        %v590 = vmax.f32 %v507, 0.0
        %v591 = vmax.f32 %v556, 0.0
        %v592 = vmax.f32 %v510, 0.0
        %v593 = vmax.f32 %v559, 0.0
        %v594 = vmax.f32 %v512, 0.0
        %v595 = vmax.f32 %v561, 0.0
        %v596 = vmax.f32 %v515, 0.0
        %v597 = vmax.f32 %v564, 0.0
        %v598 = vmax.f32 %v517, 0.0
        %v599 = vmax.f32 %v566, 0.0
        %600 = vset.pattern.permute.xlu0 1
        %601 = vperm.xlu0 %600, %v238
        %v602 = vpop.permute.xlu0 %601
        %604 = vset.pattern.permute.xlu0 1
        %605 = vperm.xlu0 %604, %v239
        %v606 = vpop.permute.xlu0 %605
        %608 = vset.pattern.permute.xlu0 1
        %609 = vperm.xlu0 %608, %v240
        %v610 = vpop.permute.xlu0 %609
        %612 = vset.pattern.permute.xlu0 1
        %613 = vperm.xlu0 %612, %v241
        %v614 = vpop.permute.xlu0 %613
        %616 = vset.pattern.permute.xlu0 1
        %617 = vperm.xlu0 %616, %v242
        %v618 = vpop.permute.xlu0 %617
        %620 = vset.pattern.permute.xlu0 1
        %621 = vperm.xlu0 %620, %v243
        %v622 = vpop.permute.xlu0 %621
        %624 = vset.pattern.permute.xlu0 1
        %625 = vperm.xlu0 %624, %v244
        %v626 = vpop.permute.xlu0 %625
        %628 = vset.pattern.permute.xlu0 1
        %629 = vperm.xlu0 %628, %v245
        %v630 = vpop.permute.xlu0 %629
        %632 = vset.pattern.permute.xlu0 1
        %633 = vperm.xlu0 %632, %v246
        %v634 = vpop.permute.xlu0 %633
        %636 = vset.pattern.permute.xlu0 1
        %637 = vperm.xlu0 %636, %v247
        %v638 = vpop.permute.xlu0 %637
        %640 = vset.pattern.permute.xlu0 1
        %641 = vperm.xlu0 %640, %v248
        %v642 = vpop.permute.xlu0 %641
        %644 = vset.pattern.permute.xlu0 1
        %645 = vperm.xlu0 %644, %v249
        %v646 = vpop.permute.xlu0 %645
        %648 = vset.pattern.permute.xlu0 1
        %649 = vperm.xlu0 %648, %v250
        %v650 = vpop.permute.xlu0 %649
        %652 = vset.pattern.permute.xlu0 1
        %653 = vperm.xlu0 %652, %v251
        %v654 = vpop.permute.xlu0 %653
        %656 = vset.pattern.permute.xlu0 1
        %657 = vperm.xlu0 %656, %v252
        %v658 = vpop.permute.xlu0 %657
        %660 = vset.pattern.permute.xlu0 1
        %661 = vperm.xlu0 %660, %v253
        %v662 = vpop.permute.xlu0 %661
        %v664 = vmul.f32 %v568, %v602
        %v665 = vmul.f32 %v569, %v602
        %v666 = vmul.f32 %v570, %v606
        %v667 = vmul.f32 %v571, %v606
        %v668 = vmul.f32 %v572, %v610
        %v669 = vmul.f32 %v573, %v610
        %v670 = vmul.f32 %v574, %v614
        %v671 = vmul.f32 %v575, %v614
        %v672 = vmul.f32 %v576, %v618
        %v673 = vmul.f32 %v577, %v618
        %v674 = vmul.f32 %v578, %v622
        %v675 = vmul.f32 %v579, %v622
        %v676 = vmul.f32 %v580, %v626
        %v677 = vmul.f32 %v581, %v626
        %v678 = vmul.f32 %v582, %v630
        %v679 = vmul.f32 %v583, %v630
        %v680 = vmul.f32 %v584, %v634
        %v681 = vmul.f32 %v585, %v634
        %v682 = vmul.f32 %v586, %v638
        %v683 = vmul.f32 %v587, %v638
        %v684 = vmul.f32 %v588, %v642
        %v685 = vmul.f32 %v589, %v642
        %v686 = vmul.f32 %v590, %v646
        %v687 = vmul.f32 %v591, %v646
        %v688 = vmul.f32 %v592, %v650
        %v689 = vmul.f32 %v593, %v650
        %v690 = vmul.f32 %v594, %v654
        %v691 = vmul.f32 %v595, %v654
        %v692 = vmul.f32 %v596, %v658
        %v693 = vmul.f32 %v597, %v658
        %v694 = vmul.f32 %v598, %v662
        %v695 = vmul.f32 %v599, %v662
        %v696 = vadd.f32 %v664, %v666
        %v697 = vadd.f32 %v696, %v668
        %v698 = vadd.f32 %v697, %v670
        %v699 = vadd.f32 %v698, %v672
        %v700 = vadd.f32 %v699, %v674
        %v701 = vadd.f32 %v700, %v676
        %v702 = vadd.f32 %v701, %v678
        %v703 = vadd.f32 %v702, %v680
        %v704 = vadd.f32 %v703, %v682
        %v705 = vadd.f32 %v704, %v684
        %v706 = vadd.f32 %v705, %v686
        %v707 = vadd.f32 %v706, %v688
        %v708 = vadd.f32 %v707, %v690
        %v709 = vadd.f32 %v708, %v692
        %v710 = vadd.f32 %v709, %v694
        %v711 = vrot.slane %v710, 4
        %v712 = vadd.f32 %v710, %v711
        %v713 = vrot.slane %v712, 2
        %v714 = vadd.f32 %v712, %v713
        %v715 = vrot.slane %v714, 1
        %v716 = vadd.f32 %v714, %v715
        %v717 = vadd.f32 %v665, %v667
        %v718 = vadd.f32 %v717, %v669
        %v719 = vadd.f32 %v718, %v671
        %v720 = vadd.f32 %v719, %v673
        %v721 = vadd.f32 %v720, %v675
        %v722 = vadd.f32 %v721, %v677
        %v723 = vadd.f32 %v722, %v679
        %v724 = vadd.f32 %v723, %v681
        %v725 = vadd.f32 %v724, %v683
        %v726 = vadd.f32 %v725, %v685
        %v727 = vadd.f32 %v726, %v687
        %v728 = vadd.f32 %v727, %v689
        %v729 = vadd.f32 %v728, %v691
        %v730 = vadd.f32 %v729, %v693
        %v731 = vadd.f32 %v730, %v695
        %v732 = vrot.slane %v731, 4
        %v733 = vadd.f32 %v731, %v732
        %v734 = vrot.slane %v733, 2
        %v735 = vadd.f32 %v733, %v734
        %v736 = vrot.slane %v735, 1
        %v737 = vadd.f32 %v735, %v736
        %v738 = vld [vmem:[%s1 + $0x40] sm:$0xf]
        %v739 = vld [vmem:[%s1 + $0x44] sm:$0xf]
        %v740 = vld [vmem:[%s1 + $0x48] sm:$0xf]
        %v741 = vld [vmem:[%s1 + $0x4c] sm:$0xf]
        %v742 = vld [vmem:[%s1 + $0x50] sm:$0xf]
        %v743 = vld [vmem:[%s1 + $0x54] sm:$0xf]
        %v744 = vld [vmem:[%s1 + $0x58] sm:$0xf]
        %v745 = vld [vmem:[%s1 + $0x5c] sm:$0xf]
        %v746 = vld [vmem:[%s1 + $0x60] sm:$0xf]
        %v747 = vld [vmem:[%s1 + $0x64] sm:$0xf]
        %v748 = vld [vmem:[%s1 + $0x68] sm:$0xf]
        %v749 = vld [vmem:[%s1 + $0x6c] sm:$0xf]
        %v750 = vld [vmem:[%s1 + $0x70] sm:$0xf]
        %v751 = vld [vmem:[%s1 + $0x74] sm:$0xf]
        %v752 = vld [vmem:[%s1 + $0x78] sm:$0xf]
        %v753 = vld [vmem:[%s1 + $0x7c] sm:$0xf]
        %755 = vset.pattern.permute.xlu0 0
        %756 = vperm.xlu0 %755, %v254
        %v757 = vpop.permute.xlu0 %756
        %760 = vset.pattern.permute.xlu0 0
        %761 = vperm.xlu0 %760, %v255
        %v762 = vpop.permute.xlu0 %761
        %765 = vset.pattern.permute.xlu0 0
        %766 = vperm.xlu0 %765, %v256
        %v767 = vpop.permute.xlu0 %766
        %770 = vset.pattern.permute.xlu0 0
        %771 = vperm.xlu0 %770, %v257
        %v772 = vpop.permute.xlu0 %771
        %775 = vset.pattern.permute.xlu0 0
        %776 = vperm.xlu0 %775, %v258
        %v777 = vpop.permute.xlu0 %776
        %780 = vset.pattern.permute.xlu0 0
        %781 = vperm.xlu0 %780, %v259
        %v782 = vpop.permute.xlu0 %781
        %785 = vset.pattern.permute.xlu0 0
        %786 = vperm.xlu0 %785, %v260
        %v787 = vpop.permute.xlu0 %786
        %790 = vset.pattern.permute.xlu0 0
        %791 = vperm.xlu0 %790, %v261
        %v792 = vpop.permute.xlu0 %791
        %795 = vset.pattern.permute.xlu0 0
        %796 = vperm.xlu0 %795, %v262
        %v797 = vpop.permute.xlu0 %796
        %800 = vset.pattern.permute.xlu0 0
        %801 = vperm.xlu0 %800, %v263
        %v802 = vpop.permute.xlu0 %801
        %805 = vset.pattern.permute.xlu0 0
        %806 = vperm.xlu0 %805, %v264
        %v807 = vpop.permute.xlu0 %806
        %810 = vset.pattern.permute.xlu0 0
        %811 = vperm.xlu0 %810, %v265
        %v812 = vpop.permute.xlu0 %811
        %815 = vset.pattern.permute.xlu0 0
        %816 = vperm.xlu0 %815, %v266
        %v817 = vpop.permute.xlu0 %816
        %820 = vset.pattern.permute.xlu0 0
        %821 = vperm.xlu0 %820, %v267
        %v822 = vpop.permute.xlu0 %821
        %825 = vset.pattern.permute.xlu0 0
        %826 = vperm.xlu0 %825, %v268
        %v827 = vpop.permute.xlu0 %826
        %830 = vset.pattern.permute.xlu0 0
        %831 = vperm.xlu0 %830, %v269
        %v832 = vpop.permute.xlu0 %831
        %v850 = vunpack.c.l.b16 %v738
        %v851 = vunpack.c.l.b16 %v739
        %v852 = vunpack.c.l.b16 %v740
        %v853 = vunpack.c.l.b16 %v741
        %v854 = vunpack.c.l.b16 %v742
        %v855 = vunpack.c.l.b16 %v743
        %v856 = vunpack.c.l.b16 %v744
        %v857 = vunpack.c.l.b16 %v745
        %v858 = vunpack.c.l.b16 %v746
        %v859 = vunpack.c.l.b16 %v747
        %v860 = vunpack.c.l.b16 %v748
        %v861 = vunpack.c.l.b16 %v749
        %v862 = vunpack.c.l.b16 %v750
        %v863 = vunpack.c.l.b16 %v751
        %v864 = vunpack.c.l.b16 %v752
        %v865 = vunpack.c.l.b16 %v753
        %v866 = vpack.c.b16 %v851, %v850
        %v867 = vpack.c.b16 %v853, %v852
        %v868 = vpack.c.b16 %v855, %v854
        %v869 = vpack.c.b16 %v857, %v856
        %v870 = vpack.c.b16 %v859, %v858
        %v871 = vpack.c.b16 %v861, %v860
        %v872 = vpack.c.b16 %v863, %v862
        %v873 = vpack.c.b16 %v865, %v864
        %v875 = vsel %vm438, %v866, 0
        %v878 = vsel %vm438, %v867, 0
        %v881 = vsel %vm438, %v868, 0
        %v884 = vsel %vm438, %v869, 0
        %v887 = vsel %vm438, %v870, 0
        %v890 = vsel %vm438, %v871, 0
        %v893 = vsel %vm438, %v872, 0
        %v896 = vsel %vm438, %v873, 0
        %898 = vmatpush.bf16.msra.mxu0 0
        %899 = vmatpush.bf16.msra.mxu0 0
        %900 = vmatpush.bf16.msra.mxu0 0
        %901 = vmatpush.bf16.msra.mxu0 0
        %902 = vmatpush.bf16.msra.mxu0 0
        %903 = vmatpush.bf16.msra.mxu0 0
        %904 = vmatpush.bf16.msra.mxu0 0
        %905 = vmatpush.bf16.msra.mxu0 %v465
        %906 = vmatmul.bf16.gmra.mxu0 %v875
        %v907 = vpop.f32.mrf.mxu0
        %v908 = vadd.f32 %v757, %v907
        %v909 = vpop.f32.mrf.mxu0
        %v910 = vadd.f32 %v762, %v909
        %911 = vmatmul.bf16.gmra.mxu0 %v878
        %v912 = vpop.f32.mrf.mxu0
        %v913 = vadd.f32 %v767, %v912
        %v914 = vpop.f32.mrf.mxu0
        %v915 = vadd.f32 %v772, %v914
        %916 = vmatmul.bf16.gmra.mxu0 %v881
        %v917 = vpop.f32.mrf.mxu0
        %v918 = vadd.f32 %v777, %v917
        %v919 = vpop.f32.mrf.mxu0
        %v920 = vadd.f32 %v782, %v919
        %921 = vmatmul.bf16.gmra.mxu0 %v884
        %v922 = vpop.f32.mrf.mxu0
        %v923 = vadd.f32 %v787, %v922
        %v924 = vpop.f32.mrf.mxu0
        %v925 = vadd.f32 %v792, %v924
        %926 = vmatmul.bf16.gmra.mxu0 %v887
        %v927 = vpop.f32.mrf.mxu0
        %v928 = vadd.f32 %v797, %v927
        %v929 = vpop.f32.mrf.mxu0
        %v930 = vadd.f32 %v802, %v929
        %931 = vmatmul.bf16.gmra.mxu0 %v890
        %v932 = vpop.f32.mrf.mxu0
        %v933 = vadd.f32 %v807, %v932
        %v934 = vpop.f32.mrf.mxu0
        %v935 = vadd.f32 %v812, %v934
        %936 = vmatmul.bf16.gmra.mxu0 %v893
        %v937 = vpop.f32.mrf.mxu0
        %v938 = vadd.f32 %v817, %v937
        %v939 = vpop.f32.mrf.mxu0
        %v940 = vadd.f32 %v822, %v939
        %941 = vmatmul.bf16.gmra.mxu0 %v896
        %v942 = vpop.f32.mrf.mxu0
        %v943 = vadd.f32 %v827, %v942
        %v944 = vpop.f32.mrf.mxu0
        %v945 = vadd.f32 %v832, %v944
        %946 = vdwg.mxu0
        %947 = vmatpush.bf16.msra.mxu0 0
        %948 = vmatpush.bf16.msra.mxu0 0
        %949 = vmatpush.bf16.msra.mxu0 0
        %950 = vmatpush.bf16.msra.mxu0 0
        %951 = vmatpush.bf16.msra.mxu0 0
        %952 = vmatpush.bf16.msra.mxu0 0
        %953 = vmatpush.bf16.msra.mxu0 0
        %954 = vmatpush.bf16.msra.mxu0 %v468
        %955 = vmatmul.bf16.gmra.mxu0 %v875
        %v956 = vpop.f32.mrf.mxu0
        %v957 = vadd.f32 %v757, %v956
        %v958 = vpop.f32.mrf.mxu0
        %v959 = vadd.f32 %v762, %v958
        %960 = vmatmul.bf16.gmra.mxu0 %v878
        %v961 = vpop.f32.mrf.mxu0
        %v962 = vadd.f32 %v767, %v961
        %v963 = vpop.f32.mrf.mxu0
        %v964 = vadd.f32 %v772, %v963
        %965 = vmatmul.bf16.gmra.mxu0 %v881
        %v966 = vpop.f32.mrf.mxu0
        %v967 = vadd.f32 %v777, %v966
        %v968 = vpop.f32.mrf.mxu0
        %v969 = vadd.f32 %v782, %v968
        %970 = vmatmul.bf16.gmra.mxu0 %v884
        %v971 = vpop.f32.mrf.mxu0
        %v972 = vadd.f32 %v787, %v971
        %v973 = vpop.f32.mrf.mxu0
        %v974 = vadd.f32 %v792, %v973
        %975 = vmatmul.bf16.gmra.mxu0 %v887
        %v976 = vpop.f32.mrf.mxu0
        %v977 = vadd.f32 %v797, %v976
        %v978 = vpop.f32.mrf.mxu0
        %v979 = vadd.f32 %v802, %v978
        %980 = vmatmul.bf16.gmra.mxu0 %v890
        %v981 = vpop.f32.mrf.mxu0
        %v982 = vadd.f32 %v807, %v981
        %v983 = vpop.f32.mrf.mxu0
        %v984 = vadd.f32 %v812, %v983
        %985 = vmatmul.bf16.gmra.mxu0 %v893
        %v986 = vpop.f32.mrf.mxu0
        %v987 = vadd.f32 %v817, %v986
        %v988 = vpop.f32.mrf.mxu0
        %v989 = vadd.f32 %v822, %v988
        %990 = vmatmul.bf16.gmra.mxu0 %v896
        %v991 = vpop.f32.mrf.mxu0
        %v992 = vadd.f32 %v827, %v991
        %v993 = vpop.f32.mrf.mxu0
        %v994 = vadd.f32 %v832, %v993
        %995 = vdwg.mxu0
        %v996 = vmax.f32 %v908, 0.0
        %v997 = vmax.f32 %v957, 0.0
        %v998 = vmax.f32 %v910, 0.0
        %v999 = vmax.f32 %v959, 0.0
        %v1000 = vmax.f32 %v913, 0.0
        %v1001 = vmax.f32 %v962, 0.0
        %v1002 = vmax.f32 %v915, 0.0
        %v1003 = vmax.f32 %v964, 0.0
        %v1004 = vmax.f32 %v918, 0.0
        %v1005 = vmax.f32 %v967, 0.0
        %v1006 = vmax.f32 %v920, 0.0
        %v1007 = vmax.f32 %v969, 0.0
        %v1008 = vmax.f32 %v923, 0.0
        %v1009 = vmax.f32 %v972, 0.0
        %v1010 = vmax.f32 %v925, 0.0
        %v1011 = vmax.f32 %v974, 0.0
        %v1012 = vmax.f32 %v928, 0.0
        %v1013 = vmax.f32 %v977, 0.0
        %v1014 = vmax.f32 %v930, 0.0
        %v1015 = vmax.f32 %v979, 0.0
        %v1016 = vmax.f32 %v933, 0.0
        %v1017 = vmax.f32 %v982, 0.0
        %v1018 = vmax.f32 %v935, 0.0
        %v1019 = vmax.f32 %v984, 0.0
        %v1020 = vmax.f32 %v938, 0.0
        %v1021 = vmax.f32 %v987, 0.0
        %v1022 = vmax.f32 %v940, 0.0
        %v1023 = vmax.f32 %v989, 0.0
        %v1024 = vmax.f32 %v943, 0.0
        %v1025 = vmax.f32 %v992, 0.0
        %v1026 = vmax.f32 %v945, 0.0
        %v1027 = vmax.f32 %v994, 0.0
        %1028 = vset.pattern.permute.xlu0 1
        %1029 = vperm.xlu0 %1028, %v254
        %v1030 = vpop.permute.xlu0 %1029
        %1032 = vset.pattern.permute.xlu0 1
        %1033 = vperm.xlu0 %1032, %v255
        %v1034 = vpop.permute.xlu0 %1033
        %1036 = vset.pattern.permute.xlu0 1
        %1037 = vperm.xlu0 %1036, %v256
        %v1038 = vpop.permute.xlu0 %1037
        %1040 = vset.pattern.permute.xlu0 1
        %1041 = vperm.xlu0 %1040, %v257
        %v1042 = vpop.permute.xlu0 %1041
        %1044 = vset.pattern.permute.xlu0 1
        %1045 = vperm.xlu0 %1044, %v258
        %v1046 = vpop.permute.xlu0 %1045
        %1048 = vset.pattern.permute.xlu0 1
        %1049 = vperm.xlu0 %1048, %v259
        %v1050 = vpop.permute.xlu0 %1049
        %1052 = vset.pattern.permute.xlu0 1
        %1053 = vperm.xlu0 %1052, %v260
        %v1054 = vpop.permute.xlu0 %1053
        %1056 = vset.pattern.permute.xlu0 1
        %1057 = vperm.xlu0 %1056, %v261
        %v1058 = vpop.permute.xlu0 %1057
        %1060 = vset.pattern.permute.xlu0 1
        %1061 = vperm.xlu0 %1060, %v262
        %v1062 = vpop.permute.xlu0 %1061
        %1064 = vset.pattern.permute.xlu0 1
        %1065 = vperm.xlu0 %1064, %v263
        %v1066 = vpop.permute.xlu0 %1065
        %1068 = vset.pattern.permute.xlu0 1
        %1069 = vperm.xlu0 %1068, %v264
        %v1070 = vpop.permute.xlu0 %1069
        %1072 = vset.pattern.permute.xlu0 1
        %1073 = vperm.xlu0 %1072, %v265
        %v1074 = vpop.permute.xlu0 %1073
        %1076 = vset.pattern.permute.xlu0 1
        %1077 = vperm.xlu0 %1076, %v266
        %v1078 = vpop.permute.xlu0 %1077
        %1080 = vset.pattern.permute.xlu0 1
        %1081 = vperm.xlu0 %1080, %v267
        %v1082 = vpop.permute.xlu0 %1081
        %1084 = vset.pattern.permute.xlu0 1
        %1085 = vperm.xlu0 %1084, %v268
        %v1086 = vpop.permute.xlu0 %1085
        %1088 = vset.pattern.permute.xlu0 1
        %1089 = vperm.xlu0 %1088, %v269
        %v1090 = vpop.permute.xlu0 %1089
        %v1092 = vmul.f32 %v996, %v1030
        %v1093 = vmul.f32 %v997, %v1030
        %v1094 = vmul.f32 %v998, %v1034
        %v1095 = vmul.f32 %v999, %v1034
        %v1096 = vmul.f32 %v1000, %v1038
        %v1097 = vmul.f32 %v1001, %v1038
        %v1098 = vmul.f32 %v1002, %v1042
        %v1099 = vmul.f32 %v1003, %v1042
        %v1100 = vmul.f32 %v1004, %v1046
        %v1101 = vmul.f32 %v1005, %v1046
        %v1102 = vmul.f32 %v1006, %v1050
        %v1103 = vmul.f32 %v1007, %v1050
        %v1104 = vmul.f32 %v1008, %v1054
        %v1105 = vmul.f32 %v1009, %v1054
        %v1106 = vmul.f32 %v1010, %v1058
        %v1107 = vmul.f32 %v1011, %v1058
        %v1108 = vmul.f32 %v1012, %v1062
        %v1109 = vmul.f32 %v1013, %v1062
        %v1110 = vmul.f32 %v1014, %v1066
        %v1111 = vmul.f32 %v1015, %v1066
        %v1112 = vmul.f32 %v1016, %v1070
        %v1113 = vmul.f32 %v1017, %v1070
        %v1114 = vmul.f32 %v1018, %v1074
        %v1115 = vmul.f32 %v1019, %v1074
        %v1116 = vmul.f32 %v1020, %v1078
        %v1117 = vmul.f32 %v1021, %v1078
        %v1118 = vmul.f32 %v1022, %v1082
        %v1119 = vmul.f32 %v1023, %v1082
        %v1120 = vmul.f32 %v1024, %v1086
        %v1121 = vmul.f32 %v1025, %v1086
        %v1122 = vmul.f32 %v1026, %v1090
        %v1123 = vmul.f32 %v1027, %v1090
        %v1124 = vadd.f32 %v1092, %v1094
        %v1125 = vadd.f32 %v1124, %v1096
        %v1126 = vadd.f32 %v1125, %v1098
        %v1127 = vadd.f32 %v1126, %v1100
        %v1128 = vadd.f32 %v1127, %v1102
        %v1129 = vadd.f32 %v1128, %v1104
        %v1130 = vadd.f32 %v1129, %v1106
        %v1131 = vadd.f32 %v1130, %v1108
        %v1132 = vadd.f32 %v1131, %v1110
        %v1133 = vadd.f32 %v1132, %v1112
        %v1134 = vadd.f32 %v1133, %v1114
        %v1135 = vadd.f32 %v1134, %v1116
        %v1136 = vadd.f32 %v1135, %v1118
        %v1137 = vadd.f32 %v1136, %v1120
        %v1138 = vadd.f32 %v1137, %v1122
        %v1139 = vrot.slane %v1138, 4
        %v1140 = vadd.f32 %v1138, %v1139
        %v1141 = vrot.slane %v1140, 2
        %v1142 = vadd.f32 %v1140, %v1141
        %v1143 = vrot.slane %v1142, 1
        %v1144 = vadd.f32 %v1142, %v1143
        %v1145 = vadd.f32 %v1093, %v1095
        %v1146 = vadd.f32 %v1145, %v1097
        %v1147 = vadd.f32 %v1146, %v1099
        %v1148 = vadd.f32 %v1147, %v1101
        %v1149 = vadd.f32 %v1148, %v1103
        %v1150 = vadd.f32 %v1149, %v1105
        %v1151 = vadd.f32 %v1150, %v1107
        %v1152 = vadd.f32 %v1151, %v1109
        %v1153 = vadd.f32 %v1152, %v1111
        %v1154 = vadd.f32 %v1153, %v1113
        %v1155 = vadd.f32 %v1154, %v1115
        %v1156 = vadd.f32 %v1155, %v1117
        %v1157 = vadd.f32 %v1156, %v1119
        %v1158 = vadd.f32 %v1157, %v1121
        %v1159 = vadd.f32 %v1158, %v1123
        %v1160 = vrot.slane %v1159, 4
        %v1161 = vadd.f32 %v1159, %v1160
        %v1162 = vrot.slane %v1161, 2
        %v1163 = vadd.f32 %v1161, %v1162
        %v1164 = vrot.slane %v1163, 1
        %v1165 = vadd.f32 %v1163, %v1164
        %v1166 = vadd.f32 %v716, %v1144
        %v1167 = vadd.f32 %v737, %v1165
        %v1168 = vld [vmem:[%s1 + $0x80] sm:$0xf]
        %v1169 = vld [vmem:[%s1 + $0x84] sm:$0xf]
        %v1170 = vld [vmem:[%s1 + $0x88] sm:$0xf]
        %v1171 = vld [vmem:[%s1 + $0x8c] sm:$0xf]
        %v1172 = vld [vmem:[%s1 + $0x90] sm:$0xf]
        %v1173 = vld [vmem:[%s1 + $0x94] sm:$0xf]
        %v1174 = vld [vmem:[%s1 + $0x98] sm:$0xf]
        %v1175 = vld [vmem:[%s1 + $0x9c] sm:$0xf]
        %v1176 = vld [vmem:[%s1 + $0xa0] sm:$0xf]
        %v1177 = vld [vmem:[%s1 + $0xa4] sm:$0xf]
        %v1178 = vld [vmem:[%s1 + $0xa8] sm:$0xf]
        %v1179 = vld [vmem:[%s1 + $0xac] sm:$0xf]
        %v1180 = vld [vmem:[%s1 + $0xb0] sm:$0xf]
        %v1181 = vld [vmem:[%s1 + $0xb4] sm:$0xf]
        %v1182 = vld [vmem:[%s1 + $0xb8] sm:$0xf]
        %v1183 = vld [vmem:[%s1 + $0xbc] sm:$0xf]
        %1185 = vset.pattern.permute.xlu0 0
        %1186 = vperm.xlu0 %1185, %v270
        %v1187 = vpop.permute.xlu0 %1186
        %1190 = vset.pattern.permute.xlu0 0
        %1191 = vperm.xlu0 %1190, %v271
        %v1192 = vpop.permute.xlu0 %1191
        %1195 = vset.pattern.permute.xlu0 0
        %1196 = vperm.xlu0 %1195, %v272
        %v1197 = vpop.permute.xlu0 %1196
        %1200 = vset.pattern.permute.xlu0 0
        %1201 = vperm.xlu0 %1200, %v273
        %v1202 = vpop.permute.xlu0 %1201
        %1205 = vset.pattern.permute.xlu0 0
        %1206 = vperm.xlu0 %1205, %v274
        %v1207 = vpop.permute.xlu0 %1206
        %1210 = vset.pattern.permute.xlu0 0
        %1211 = vperm.xlu0 %1210, %v275
        %v1212 = vpop.permute.xlu0 %1211
        %1215 = vset.pattern.permute.xlu0 0
        %1216 = vperm.xlu0 %1215, %v276
        %v1217 = vpop.permute.xlu0 %1216
        %1220 = vset.pattern.permute.xlu0 0
        %1221 = vperm.xlu0 %1220, %v277
        %v1222 = vpop.permute.xlu0 %1221
        %1225 = vset.pattern.permute.xlu0 0
        %1226 = vperm.xlu0 %1225, %v278
        %v1227 = vpop.permute.xlu0 %1226
        %1230 = vset.pattern.permute.xlu0 0
        %1231 = vperm.xlu0 %1230, %v279
        %v1232 = vpop.permute.xlu0 %1231
        %1235 = vset.pattern.permute.xlu0 0
        %1236 = vperm.xlu0 %1235, %v280
        %v1237 = vpop.permute.xlu0 %1236
        %1240 = vset.pattern.permute.xlu0 0
        %1241 = vperm.xlu0 %1240, %v281
        %v1242 = vpop.permute.xlu0 %1241
        %1245 = vset.pattern.permute.xlu0 0
        %1246 = vperm.xlu0 %1245, %v282
        %v1247 = vpop.permute.xlu0 %1246
        %1250 = vset.pattern.permute.xlu0 0
        %1251 = vperm.xlu0 %1250, %v283
        %v1252 = vpop.permute.xlu0 %1251
        %1255 = vset.pattern.permute.xlu0 0
        %1256 = vperm.xlu0 %1255, %v284
        %v1257 = vpop.permute.xlu0 %1256
        %1260 = vset.pattern.permute.xlu0 0
        %1261 = vperm.xlu0 %1260, %v285
        %v1262 = vpop.permute.xlu0 %1261
        %v1280 = vunpack.c.l.b16 %v1168
        %v1281 = vunpack.c.l.b16 %v1169
        %v1282 = vunpack.c.l.b16 %v1170
        %v1283 = vunpack.c.l.b16 %v1171
        %v1284 = vunpack.c.l.b16 %v1172
        %v1285 = vunpack.c.l.b16 %v1173
        %v1286 = vunpack.c.l.b16 %v1174
        %v1287 = vunpack.c.l.b16 %v1175
        %v1288 = vunpack.c.l.b16 %v1176
        %v1289 = vunpack.c.l.b16 %v1177
        %v1290 = vunpack.c.l.b16 %v1178
        %v1291 = vunpack.c.l.b16 %v1179
        %v1292 = vunpack.c.l.b16 %v1180
        %v1293 = vunpack.c.l.b16 %v1181
        %v1294 = vunpack.c.l.b16 %v1182
        %v1295 = vunpack.c.l.b16 %v1183
        %v1296 = vpack.c.b16 %v1281, %v1280
        %v1297 = vpack.c.b16 %v1283, %v1282
        %v1298 = vpack.c.b16 %v1285, %v1284
        %v1299 = vpack.c.b16 %v1287, %v1286
        %v1300 = vpack.c.b16 %v1289, %v1288
        %v1301 = vpack.c.b16 %v1291, %v1290
        %v1302 = vpack.c.b16 %v1293, %v1292
        %v1303 = vpack.c.b16 %v1295, %v1294
        %v1305 = vsel %vm438, %v1296, 0
        %v1308 = vsel %vm438, %v1297, 0
        %v1311 = vsel %vm438, %v1298, 0
        %v1314 = vsel %vm438, %v1299, 0
        %v1317 = vsel %vm438, %v1300, 0
        %v1320 = vsel %vm438, %v1301, 0
        %v1323 = vsel %vm438, %v1302, 0
        %v1326 = vsel %vm438, %v1303, 0
        %1328 = vmatpush.bf16.msra.mxu0 0
        %1329 = vmatpush.bf16.msra.mxu0 0
        %1330 = vmatpush.bf16.msra.mxu0 0
        %1331 = vmatpush.bf16.msra.mxu0 0
        %1332 = vmatpush.bf16.msra.mxu0 0
        %1333 = vmatpush.bf16.msra.mxu0 0
        %1334 = vmatpush.bf16.msra.mxu0 0
        %1335 = vmatpush.bf16.msra.mxu0 %v465
        %1336 = vmatmul.bf16.gmra.mxu0 %v1305
        %v1337 = vpop.f32.mrf.mxu0
        %v1338 = vadd.f32 %v1187, %v1337
        %v1339 = vpop.f32.mrf.mxu0
        %v1340 = vadd.f32 %v1192, %v1339
        %1341 = vmatmul.bf16.gmra.mxu0 %v1308
        %v1342 = vpop.f32.mrf.mxu0
        %v1343 = vadd.f32 %v1197, %v1342
        %v1344 = vpop.f32.mrf.mxu0
        %v1345 = vadd.f32 %v1202, %v1344
        %1346 = vmatmul.bf16.gmra.mxu0 %v1311
        %v1347 = vpop.f32.mrf.mxu0
        %v1348 = vadd.f32 %v1207, %v1347
        %v1349 = vpop.f32.mrf.mxu0
        %v1350 = vadd.f32 %v1212, %v1349
        %1351 = vmatmul.bf16.gmra.mxu0 %v1314
        %v1352 = vpop.f32.mrf.mxu0
        %v1353 = vadd.f32 %v1217, %v1352
        %v1354 = vpop.f32.mrf.mxu0
        %v1355 = vadd.f32 %v1222, %v1354
        %1356 = vmatmul.bf16.gmra.mxu0 %v1317
        %v1357 = vpop.f32.mrf.mxu0
        %v1358 = vadd.f32 %v1227, %v1357
        %v1359 = vpop.f32.mrf.mxu0
        %v1360 = vadd.f32 %v1232, %v1359
        %1361 = vmatmul.bf16.gmra.mxu0 %v1320
        %v1362 = vpop.f32.mrf.mxu0
        %v1363 = vadd.f32 %v1237, %v1362
        %v1364 = vpop.f32.mrf.mxu0
        %v1365 = vadd.f32 %v1242, %v1364
        %1366 = vmatmul.bf16.gmra.mxu0 %v1323
        %v1367 = vpop.f32.mrf.mxu0
        %v1368 = vadd.f32 %v1247, %v1367
        %v1369 = vpop.f32.mrf.mxu0
        %v1370 = vadd.f32 %v1252, %v1369
        %1371 = vmatmul.bf16.gmra.mxu0 %v1326
        %v1372 = vpop.f32.mrf.mxu0
        %v1373 = vadd.f32 %v1257, %v1372
        %v1374 = vpop.f32.mrf.mxu0
        %v1375 = vadd.f32 %v1262, %v1374
        %1376 = vdwg.mxu0
        %1377 = vmatpush.bf16.msra.mxu0 0
        %1378 = vmatpush.bf16.msra.mxu0 0
        %1379 = vmatpush.bf16.msra.mxu0 0
        %1380 = vmatpush.bf16.msra.mxu0 0
        %1381 = vmatpush.bf16.msra.mxu0 0
        %1382 = vmatpush.bf16.msra.mxu0 0
        %1383 = vmatpush.bf16.msra.mxu0 0
        %1384 = vmatpush.bf16.msra.mxu0 %v468
        %1385 = vmatmul.bf16.gmra.mxu0 %v1305
        %v1386 = vpop.f32.mrf.mxu0
        %v1387 = vadd.f32 %v1187, %v1386
        %v1388 = vpop.f32.mrf.mxu0
        %v1389 = vadd.f32 %v1192, %v1388
        %1390 = vmatmul.bf16.gmra.mxu0 %v1308
        %v1391 = vpop.f32.mrf.mxu0
        %v1392 = vadd.f32 %v1197, %v1391
        %v1393 = vpop.f32.mrf.mxu0
        %v1394 = vadd.f32 %v1202, %v1393
        %1395 = vmatmul.bf16.gmra.mxu0 %v1311
        %v1396 = vpop.f32.mrf.mxu0
        %v1397 = vadd.f32 %v1207, %v1396
        %v1398 = vpop.f32.mrf.mxu0
        %v1399 = vadd.f32 %v1212, %v1398
        %1400 = vmatmul.bf16.gmra.mxu0 %v1314
        %v1401 = vpop.f32.mrf.mxu0
        %v1402 = vadd.f32 %v1217, %v1401
        %v1403 = vpop.f32.mrf.mxu0
        %v1404 = vadd.f32 %v1222, %v1403
        %1405 = vmatmul.bf16.gmra.mxu0 %v1317
        %v1406 = vpop.f32.mrf.mxu0
        %v1407 = vadd.f32 %v1227, %v1406
        %v1408 = vpop.f32.mrf.mxu0
        %v1409 = vadd.f32 %v1232, %v1408
        %1410 = vmatmul.bf16.gmra.mxu0 %v1320
        %v1411 = vpop.f32.mrf.mxu0
        %v1412 = vadd.f32 %v1237, %v1411
        %v1413 = vpop.f32.mrf.mxu0
        %v1414 = vadd.f32 %v1242, %v1413
        %1415 = vmatmul.bf16.gmra.mxu0 %v1323
        %v1416 = vpop.f32.mrf.mxu0
        %v1417 = vadd.f32 %v1247, %v1416
        %v1418 = vpop.f32.mrf.mxu0
        %v1419 = vadd.f32 %v1252, %v1418
        %1420 = vmatmul.bf16.gmra.mxu0 %v1326
        %v1421 = vpop.f32.mrf.mxu0
        %v1422 = vadd.f32 %v1257, %v1421
        %v1423 = vpop.f32.mrf.mxu0
        %v1424 = vadd.f32 %v1262, %v1423
        %1425 = vdwg.mxu0
        %v1426 = vmax.f32 %v1338, 0.0
        %v1427 = vmax.f32 %v1387, 0.0
        %v1428 = vmax.f32 %v1340, 0.0
        %v1429 = vmax.f32 %v1389, 0.0
        %v1430 = vmax.f32 %v1343, 0.0
        %v1431 = vmax.f32 %v1392, 0.0
        %v1432 = vmax.f32 %v1345, 0.0
        %v1433 = vmax.f32 %v1394, 0.0
        %v1434 = vmax.f32 %v1348, 0.0
        %v1435 = vmax.f32 %v1397, 0.0
        %v1436 = vmax.f32 %v1350, 0.0
        %v1437 = vmax.f32 %v1399, 0.0
        %v1438 = vmax.f32 %v1353, 0.0
        %v1439 = vmax.f32 %v1402, 0.0
        %v1440 = vmax.f32 %v1355, 0.0
        %v1441 = vmax.f32 %v1404, 0.0
        %v1442 = vmax.f32 %v1358, 0.0
        %v1443 = vmax.f32 %v1407, 0.0
        %v1444 = vmax.f32 %v1360, 0.0
        %v1445 = vmax.f32 %v1409, 0.0
        %v1446 = vmax.f32 %v1363, 0.0
        %v1447 = vmax.f32 %v1412, 0.0
        %v1448 = vmax.f32 %v1365, 0.0
        %v1449 = vmax.f32 %v1414, 0.0
        %v1450 = vmax.f32 %v1368, 0.0
        %v1451 = vmax.f32 %v1417, 0.0
        %v1452 = vmax.f32 %v1370, 0.0
        %v1453 = vmax.f32 %v1419, 0.0
        %v1454 = vmax.f32 %v1373, 0.0
        %v1455 = vmax.f32 %v1422, 0.0
        %v1456 = vmax.f32 %v1375, 0.0
        %v1457 = vmax.f32 %v1424, 0.0
        %1458 = vset.pattern.permute.xlu0 1
        %1459 = vperm.xlu0 %1458, %v270
        %v1460 = vpop.permute.xlu0 %1459
        %1462 = vset.pattern.permute.xlu0 1
        %1463 = vperm.xlu0 %1462, %v271
        %v1464 = vpop.permute.xlu0 %1463
        %1466 = vset.pattern.permute.xlu0 1
        %1467 = vperm.xlu0 %1466, %v272
        %v1468 = vpop.permute.xlu0 %1467
        %1470 = vset.pattern.permute.xlu0 1
        %1471 = vperm.xlu0 %1470, %v273
        %v1472 = vpop.permute.xlu0 %1471
        %1474 = vset.pattern.permute.xlu0 1
        %1475 = vperm.xlu0 %1474, %v274
        %v1476 = vpop.permute.xlu0 %1475
        %1478 = vset.pattern.permute.xlu0 1
        %1479 = vperm.xlu0 %1478, %v275
        %v1480 = vpop.permute.xlu0 %1479
        %1482 = vset.pattern.permute.xlu0 1
        %1483 = vperm.xlu0 %1482, %v276
        %v1484 = vpop.permute.xlu0 %1483
        %1486 = vset.pattern.permute.xlu0 1
        %1487 = vperm.xlu0 %1486, %v277
        %v1488 = vpop.permute.xlu0 %1487
        %1490 = vset.pattern.permute.xlu0 1
        %1491 = vperm.xlu0 %1490, %v278
        %v1492 = vpop.permute.xlu0 %1491
        %1494 = vset.pattern.permute.xlu0 1
        %1495 = vperm.xlu0 %1494, %v279
        %v1496 = vpop.permute.xlu0 %1495
        %1498 = vset.pattern.permute.xlu0 1
        %1499 = vperm.xlu0 %1498, %v280
        %v1500 = vpop.permute.xlu0 %1499
        %1502 = vset.pattern.permute.xlu0 1
        %1503 = vperm.xlu0 %1502, %v281
        %v1504 = vpop.permute.xlu0 %1503
        %1506 = vset.pattern.permute.xlu0 1
        %1507 = vperm.xlu0 %1506, %v282
        %v1508 = vpop.permute.xlu0 %1507
        %1510 = vset.pattern.permute.xlu0 1
        %1511 = vperm.xlu0 %1510, %v283
        %v1512 = vpop.permute.xlu0 %1511
        %1514 = vset.pattern.permute.xlu0 1
        %1515 = vperm.xlu0 %1514, %v284
        %v1516 = vpop.permute.xlu0 %1515
        %1518 = vset.pattern.permute.xlu0 1
        %1519 = vperm.xlu0 %1518, %v285
        %v1520 = vpop.permute.xlu0 %1519
        %v1522 = vmul.f32 %v1426, %v1460
        %v1523 = vmul.f32 %v1427, %v1460
        %v1524 = vmul.f32 %v1428, %v1464
        %v1525 = vmul.f32 %v1429, %v1464
        %v1526 = vmul.f32 %v1430, %v1468
        %v1527 = vmul.f32 %v1431, %v1468
        %v1528 = vmul.f32 %v1432, %v1472
        %v1529 = vmul.f32 %v1433, %v1472
        %v1530 = vmul.f32 %v1434, %v1476
        %v1531 = vmul.f32 %v1435, %v1476
        %v1532 = vmul.f32 %v1436, %v1480
        %v1533 = vmul.f32 %v1437, %v1480
        %v1534 = vmul.f32 %v1438, %v1484
        %v1535 = vmul.f32 %v1439, %v1484
        %v1536 = vmul.f32 %v1440, %v1488
        %v1537 = vmul.f32 %v1441, %v1488
        %v1538 = vmul.f32 %v1442, %v1492
        %v1539 = vmul.f32 %v1443, %v1492
        %v1540 = vmul.f32 %v1444, %v1496
        %v1541 = vmul.f32 %v1445, %v1496
        %v1542 = vmul.f32 %v1446, %v1500
        %v1543 = vmul.f32 %v1447, %v1500
        %v1544 = vmul.f32 %v1448, %v1504
        %v1545 = vmul.f32 %v1449, %v1504
        %v1546 = vmul.f32 %v1450, %v1508
        %v1547 = vmul.f32 %v1451, %v1508
        %v1548 = vmul.f32 %v1452, %v1512
        %v1549 = vmul.f32 %v1453, %v1512
        %v1550 = vmul.f32 %v1454, %v1516
        %v1551 = vmul.f32 %v1455, %v1516
        %v1552 = vmul.f32 %v1456, %v1520
        %v1553 = vmul.f32 %v1457, %v1520
        %v1554 = vadd.f32 %v1522, %v1524
        %v1555 = vadd.f32 %v1554, %v1526
        %v1556 = vadd.f32 %v1555, %v1528
        %v1557 = vadd.f32 %v1556, %v1530
        %v1558 = vadd.f32 %v1557, %v1532
        %v1559 = vadd.f32 %v1558, %v1534
        %v1560 = vadd.f32 %v1559, %v1536
        %v1561 = vadd.f32 %v1560, %v1538
        %v1562 = vadd.f32 %v1561, %v1540
        %v1563 = vadd.f32 %v1562, %v1542
        %v1564 = vadd.f32 %v1563, %v1544
        %v1565 = vadd.f32 %v1564, %v1546
        %v1566 = vadd.f32 %v1565, %v1548
        %v1567 = vadd.f32 %v1566, %v1550
        %v1568 = vadd.f32 %v1567, %v1552
        %v1569 = vrot.slane %v1568, 4
        %v1570 = vadd.f32 %v1568, %v1569
        %v1571 = vrot.slane %v1570, 2
        %v1572 = vadd.f32 %v1570, %v1571
        %v1573 = vrot.slane %v1572, 1
        %v1574 = vadd.f32 %v1572, %v1573
        %v1575 = vadd.f32 %v1523, %v1525
        %v1576 = vadd.f32 %v1575, %v1527
        %v1577 = vadd.f32 %v1576, %v1529
        %v1578 = vadd.f32 %v1577, %v1531
        %v1579 = vadd.f32 %v1578, %v1533
        %v1580 = vadd.f32 %v1579, %v1535
        %v1581 = vadd.f32 %v1580, %v1537
        %v1582 = vadd.f32 %v1581, %v1539
        %v1583 = vadd.f32 %v1582, %v1541
        %v1584 = vadd.f32 %v1583, %v1543
        %v1585 = vadd.f32 %v1584, %v1545
        %v1586 = vadd.f32 %v1585, %v1547
        %v1587 = vadd.f32 %v1586, %v1549
        %v1588 = vadd.f32 %v1587, %v1551
        %v1589 = vadd.f32 %v1588, %v1553
        %v1590 = vrot.slane %v1589, 4
        %v1591 = vadd.f32 %v1589, %v1590
        %v1592 = vrot.slane %v1591, 2
        %v1593 = vadd.f32 %v1591, %v1592
        %v1594 = vrot.slane %v1593, 1
        %v1595 = vadd.f32 %v1593, %v1594
        %v1596 = vadd.f32 %v1166, %v1574
        %v1597 = vadd.f32 %v1167, %v1595
        %v1598 = vld [vmem:[%s1 + $0xc0] sm:$0xf]
        %v1599 = vld [vmem:[%s1 + $0xc4] sm:$0xf]
        %v1600 = vld [vmem:[%s1 + $0xc8] sm:$0xf]
        %v1601 = vld [vmem:[%s1 + $0xcc] sm:$0xf]
        %v1602 = vld [vmem:[%s1 + $0xd0] sm:$0xf]
        %v1603 = vld [vmem:[%s1 + $0xd4] sm:$0xf]
        %v1604 = vld [vmem:[%s1 + $0xd8] sm:$0xf]
        %v1605 = vld [vmem:[%s1 + $0xdc] sm:$0xf]
        %v1606 = vld [vmem:[%s1 + $0xe0] sm:$0xf]
        %v1607 = vld [vmem:[%s1 + $0xe4] sm:$0xf]
        %v1608 = vld [vmem:[%s1 + $0xe8] sm:$0xf]
        %v1609 = vld [vmem:[%s1 + $0xec] sm:$0xf]
        %v1610 = vld [vmem:[%s1 + $0xf0] sm:$0xf]
        %v1611 = vld [vmem:[%s1 + $0xf4] sm:$0xf]
        %v1612 = vld [vmem:[%s1 + $0xf8] sm:$0xf]
        %v1613 = vld [vmem:[%s1 + $0xfc] sm:$0xf]
        %1615 = vset.pattern.permute.xlu0 0
        %1616 = vperm.xlu0 %1615, %v286
        %v1617 = vpop.permute.xlu0 %1616
        %1620 = vset.pattern.permute.xlu0 0
        %1621 = vperm.xlu0 %1620, %v287
        %v1622 = vpop.permute.xlu0 %1621
        %1625 = vset.pattern.permute.xlu0 0
        %1626 = vperm.xlu0 %1625, %v288
        %v1627 = vpop.permute.xlu0 %1626
        %1630 = vset.pattern.permute.xlu0 0
        %1631 = vperm.xlu0 %1630, %v289
        %v1632 = vpop.permute.xlu0 %1631
        %1635 = vset.pattern.permute.xlu0 0
        %1636 = vperm.xlu0 %1635, %v290
        %v1637 = vpop.permute.xlu0 %1636
        %1640 = vset.pattern.permute.xlu0 0
        %1641 = vperm.xlu0 %1640, %v291
        %v1642 = vpop.permute.xlu0 %1641
        %1645 = vset.pattern.permute.xlu0 0
        %1646 = vperm.xlu0 %1645, %v292
        %v1647 = vpop.permute.xlu0 %1646
        %1650 = vset.pattern.permute.xlu0 0
        %1651 = vperm.xlu0 %1650, %v293
        %v1652 = vpop.permute.xlu0 %1651
        %1655 = vset.pattern.permute.xlu0 0
        %1656 = vperm.xlu0 %1655, %v294
        %v1657 = vpop.permute.xlu0 %1656
        %1660 = vset.pattern.permute.xlu0 0
        %1661 = vperm.xlu0 %1660, %v295
        %v1662 = vpop.permute.xlu0 %1661
        %1665 = vset.pattern.permute.xlu0 0
        %1666 = vperm.xlu0 %1665, %v296
        %v1667 = vpop.permute.xlu0 %1666
        %1670 = vset.pattern.permute.xlu0 0
        %1671 = vperm.xlu0 %1670, %v297
        %v1672 = vpop.permute.xlu0 %1671
        %1675 = vset.pattern.permute.xlu0 0
        %1676 = vperm.xlu0 %1675, %v298
        %v1677 = vpop.permute.xlu0 %1676
        %1680 = vset.pattern.permute.xlu0 0
        %1681 = vperm.xlu0 %1680, %v299
        %v1682 = vpop.permute.xlu0 %1681
        %1685 = vset.pattern.permute.xlu0 0
        %1686 = vperm.xlu0 %1685, %v300
        %v1687 = vpop.permute.xlu0 %1686
        %1690 = vset.pattern.permute.xlu0 0
        %1691 = vperm.xlu0 %1690, %v301
        %v1692 = vpop.permute.xlu0 %1691
        %v1710 = vunpack.c.l.b16 %v1598
        %v1711 = vunpack.c.l.b16 %v1599
        %v1712 = vunpack.c.l.b16 %v1600
        %v1713 = vunpack.c.l.b16 %v1601
        %v1714 = vunpack.c.l.b16 %v1602
        %v1715 = vunpack.c.l.b16 %v1603
        %v1716 = vunpack.c.l.b16 %v1604
        %v1717 = vunpack.c.l.b16 %v1605
        %v1718 = vunpack.c.l.b16 %v1606
        %v1719 = vunpack.c.l.b16 %v1607
        %v1720 = vunpack.c.l.b16 %v1608
        %v1721 = vunpack.c.l.b16 %v1609
        %v1722 = vunpack.c.l.b16 %v1610
        %v1723 = vunpack.c.l.b16 %v1611
        %v1724 = vunpack.c.l.b16 %v1612
        %v1725 = vunpack.c.l.b16 %v1613
        %v1726 = vpack.c.b16 %v1711, %v1710
        %v1727 = vpack.c.b16 %v1713, %v1712
        %v1728 = vpack.c.b16 %v1715, %v1714
        %v1729 = vpack.c.b16 %v1717, %v1716
        %v1730 = vpack.c.b16 %v1719, %v1718
        %v1731 = vpack.c.b16 %v1721, %v1720
        %v1732 = vpack.c.b16 %v1723, %v1722
        %v1733 = vpack.c.b16 %v1725, %v1724
        %v1735 = vsel %vm438, %v1726, 0
        %v1738 = vsel %vm438, %v1727, 0
        %v1741 = vsel %vm438, %v1728, 0
        %v1744 = vsel %vm438, %v1729, 0
        %v1747 = vsel %vm438, %v1730, 0
        %v1750 = vsel %vm438, %v1731, 0
        %v1753 = vsel %vm438, %v1732, 0
        %v1756 = vsel %vm438, %v1733, 0
        %1758 = vmatpush.bf16.msra.mxu0 0
        %1759 = vmatpush.bf16.msra.mxu0 0
        %1760 = vmatpush.bf16.msra.mxu0 0
        %1761 = vmatpush.bf16.msra.mxu0 0
        %1762 = vmatpush.bf16.msra.mxu0 0
        %1763 = vmatpush.bf16.msra.mxu0 0
        %1764 = vmatpush.bf16.msra.mxu0 0
        %1765 = vmatpush.bf16.msra.mxu0 %v465
        %1766 = vmatmul.bf16.gmra.mxu0 %v1735
        %v1767 = vpop.f32.mrf.mxu0
        %v1768 = vadd.f32 %v1617, %v1767
        %v1769 = vpop.f32.mrf.mxu0
        %v1770 = vadd.f32 %v1622, %v1769
        %1771 = vmatmul.bf16.gmra.mxu0 %v1738
        %v1772 = vpop.f32.mrf.mxu0
        %v1773 = vadd.f32 %v1627, %v1772
        %v1774 = vpop.f32.mrf.mxu0
        %v1775 = vadd.f32 %v1632, %v1774
        %1776 = vmatmul.bf16.gmra.mxu0 %v1741
        %v1777 = vpop.f32.mrf.mxu0
        %v1778 = vadd.f32 %v1637, %v1777
        %v1779 = vpop.f32.mrf.mxu0
        %v1780 = vadd.f32 %v1642, %v1779
        %1781 = vmatmul.bf16.gmra.mxu0 %v1744
        %v1782 = vpop.f32.mrf.mxu0
        %v1783 = vadd.f32 %v1647, %v1782
        %v1784 = vpop.f32.mrf.mxu0
        %v1785 = vadd.f32 %v1652, %v1784
        %1786 = vmatmul.bf16.gmra.mxu0 %v1747
        %v1787 = vpop.f32.mrf.mxu0
        %v1788 = vadd.f32 %v1657, %v1787
        %v1789 = vpop.f32.mrf.mxu0
        %v1790 = vadd.f32 %v1662, %v1789
        %1791 = vmatmul.bf16.gmra.mxu0 %v1750
        %v1792 = vpop.f32.mrf.mxu0
        %v1793 = vadd.f32 %v1667, %v1792
        %v1794 = vpop.f32.mrf.mxu0
        %v1795 = vadd.f32 %v1672, %v1794
        %1796 = vmatmul.bf16.gmra.mxu0 %v1753
        %v1797 = vpop.f32.mrf.mxu0
        %v1798 = vadd.f32 %v1677, %v1797
        %v1799 = vpop.f32.mrf.mxu0
        %v1800 = vadd.f32 %v1682, %v1799
        %1801 = vmatmul.bf16.gmra.mxu0 %v1756
        %v1802 = vpop.f32.mrf.mxu0
        %v1803 = vadd.f32 %v1687, %v1802
        %v1804 = vpop.f32.mrf.mxu0
        %v1805 = vadd.f32 %v1692, %v1804
        %1806 = vdwg.mxu0
        %1807 = vmatpush.bf16.msra.mxu0 0
        %1808 = vmatpush.bf16.msra.mxu0 0
        %1809 = vmatpush.bf16.msra.mxu0 0
        %1810 = vmatpush.bf16.msra.mxu0 0
        %1811 = vmatpush.bf16.msra.mxu0 0
        %1812 = vmatpush.bf16.msra.mxu0 0
        %1813 = vmatpush.bf16.msra.mxu0 0
        %1814 = vmatpush.bf16.msra.mxu0 %v468
        %1815 = vmatmul.bf16.gmra.mxu0 %v1735
        %v1816 = vpop.f32.mrf.mxu0
        %v1817 = vadd.f32 %v1617, %v1816
        %v1818 = vpop.f32.mrf.mxu0
        %v1819 = vadd.f32 %v1622, %v1818
        %1820 = vmatmul.bf16.gmra.mxu0 %v1738
        %v1821 = vpop.f32.mrf.mxu0
        %v1822 = vadd.f32 %v1627, %v1821
        %v1823 = vpop.f32.mrf.mxu0
        %v1824 = vadd.f32 %v1632, %v1823
        %1825 = vmatmul.bf16.gmra.mxu0 %v1741
        %v1826 = vpop.f32.mrf.mxu0
        %v1827 = vadd.f32 %v1637, %v1826
        %v1828 = vpop.f32.mrf.mxu0
        %v1829 = vadd.f32 %v1642, %v1828
        %1830 = vmatmul.bf16.gmra.mxu0 %v1744
        %v1831 = vpop.f32.mrf.mxu0
        %v1832 = vadd.f32 %v1647, %v1831
        %v1833 = vpop.f32.mrf.mxu0
        %v1834 = vadd.f32 %v1652, %v1833
        %1835 = vmatmul.bf16.gmra.mxu0 %v1747
        %v1836 = vpop.f32.mrf.mxu0
        %v1837 = vadd.f32 %v1657, %v1836
        %v1838 = vpop.f32.mrf.mxu0
        %v1839 = vadd.f32 %v1662, %v1838
        %1840 = vmatmul.bf16.gmra.mxu0 %v1750
        %v1841 = vpop.f32.mrf.mxu0
        %v1842 = vadd.f32 %v1667, %v1841
        %v1843 = vpop.f32.mrf.mxu0
        %v1844 = vadd.f32 %v1672, %v1843
        %1845 = vmatmul.bf16.gmra.mxu0 %v1753
        %v1846 = vpop.f32.mrf.mxu0
        %v1847 = vadd.f32 %v1677, %v1846
        %v1848 = vpop.f32.mrf.mxu0
        %v1849 = vadd.f32 %v1682, %v1848
        %1850 = vmatmul.bf16.gmra.mxu0 %v1756
        %v1851 = vpop.f32.mrf.mxu0
        %v1852 = vadd.f32 %v1687, %v1851
        %v1853 = vpop.f32.mrf.mxu0
        %v1854 = vadd.f32 %v1692, %v1853
        %1855 = vdwg.mxu0
        %v1856 = vmax.f32 %v1768, 0.0
        %v1857 = vmax.f32 %v1817, 0.0
        %v1858 = vmax.f32 %v1770, 0.0
        %v1859 = vmax.f32 %v1819, 0.0
        %v1860 = vmax.f32 %v1773, 0.0
        %v1861 = vmax.f32 %v1822, 0.0
        %v1862 = vmax.f32 %v1775, 0.0
        %v1863 = vmax.f32 %v1824, 0.0
        %v1864 = vmax.f32 %v1778, 0.0
        %v1865 = vmax.f32 %v1827, 0.0
        %v1866 = vmax.f32 %v1780, 0.0
        %v1867 = vmax.f32 %v1829, 0.0
        %v1868 = vmax.f32 %v1783, 0.0
        %v1869 = vmax.f32 %v1832, 0.0
        %v1870 = vmax.f32 %v1785, 0.0
        %v1871 = vmax.f32 %v1834, 0.0
        %v1872 = vmax.f32 %v1788, 0.0
        %v1873 = vmax.f32 %v1837, 0.0
        %v1874 = vmax.f32 %v1790, 0.0
        %v1875 = vmax.f32 %v1839, 0.0
        %v1876 = vmax.f32 %v1793, 0.0
        %v1877 = vmax.f32 %v1842, 0.0
        %v1878 = vmax.f32 %v1795, 0.0
        %v1879 = vmax.f32 %v1844, 0.0
        %v1880 = vmax.f32 %v1798, 0.0
        %v1881 = vmax.f32 %v1847, 0.0
        %v1882 = vmax.f32 %v1800, 0.0
        %v1883 = vmax.f32 %v1849, 0.0
        %v1884 = vmax.f32 %v1803, 0.0
        %v1885 = vmax.f32 %v1852, 0.0
        %v1886 = vmax.f32 %v1805, 0.0
        %v1887 = vmax.f32 %v1854, 0.0
        %1888 = vset.pattern.permute.xlu0 1
        %1889 = vperm.xlu0 %1888, %v286
        %v1890 = vpop.permute.xlu0 %1889
        %1892 = vset.pattern.permute.xlu0 1
        %1893 = vperm.xlu0 %1892, %v287
        %v1894 = vpop.permute.xlu0 %1893
        %1896 = vset.pattern.permute.xlu0 1
        %1897 = vperm.xlu0 %1896, %v288
        %v1898 = vpop.permute.xlu0 %1897
        %1900 = vset.pattern.permute.xlu0 1
        %1901 = vperm.xlu0 %1900, %v289
        %v1902 = vpop.permute.xlu0 %1901
        %1904 = vset.pattern.permute.xlu0 1
        %1905 = vperm.xlu0 %1904, %v290
        %v1906 = vpop.permute.xlu0 %1905
        %1908 = vset.pattern.permute.xlu0 1
        %1909 = vperm.xlu0 %1908, %v291
        %v1910 = vpop.permute.xlu0 %1909
        %1912 = vset.pattern.permute.xlu0 1
        %1913 = vperm.xlu0 %1912, %v292
        %v1914 = vpop.permute.xlu0 %1913
        %1916 = vset.pattern.permute.xlu0 1
        %1917 = vperm.xlu0 %1916, %v293
        %v1918 = vpop.permute.xlu0 %1917
        %1920 = vset.pattern.permute.xlu0 1
        %1921 = vperm.xlu0 %1920, %v294
        %v1922 = vpop.permute.xlu0 %1921
        %1924 = vset.pattern.permute.xlu0 1
        %1925 = vperm.xlu0 %1924, %v295
        %v1926 = vpop.permute.xlu0 %1925
        %1928 = vset.pattern.permute.xlu0 1
        %1929 = vperm.xlu0 %1928, %v296
        %v1930 = vpop.permute.xlu0 %1929
        %1932 = vset.pattern.permute.xlu0 1
        %1933 = vperm.xlu0 %1932, %v297
        %v1934 = vpop.permute.xlu0 %1933
        %1936 = vset.pattern.permute.xlu0 1
        %1937 = vperm.xlu0 %1936, %v298
        %v1938 = vpop.permute.xlu0 %1937
        %1940 = vset.pattern.permute.xlu0 1
        %1941 = vperm.xlu0 %1940, %v299
        %v1942 = vpop.permute.xlu0 %1941
        %1944 = vset.pattern.permute.xlu0 1
        %1945 = vperm.xlu0 %1944, %v300
        %v1946 = vpop.permute.xlu0 %1945
        %1948 = vset.pattern.permute.xlu0 1
        %1949 = vperm.xlu0 %1948, %v301
        %v1950 = vpop.permute.xlu0 %1949
        %v1952 = vmul.f32 %v1856, %v1890
        %v1953 = vmul.f32 %v1857, %v1890
        %v1954 = vmul.f32 %v1858, %v1894
        %v1955 = vmul.f32 %v1859, %v1894
        %v1956 = vmul.f32 %v1860, %v1898
        %v1957 = vmul.f32 %v1861, %v1898
        %v1958 = vmul.f32 %v1862, %v1902
        %v1959 = vmul.f32 %v1863, %v1902
        %v1960 = vmul.f32 %v1864, %v1906
        %v1961 = vmul.f32 %v1865, %v1906
        %v1962 = vmul.f32 %v1866, %v1910
        %v1963 = vmul.f32 %v1867, %v1910
        %v1964 = vmul.f32 %v1868, %v1914
        %v1965 = vmul.f32 %v1869, %v1914
        %v1966 = vmul.f32 %v1870, %v1918
        %v1967 = vmul.f32 %v1871, %v1918
        %v1968 = vmul.f32 %v1872, %v1922
        %v1969 = vmul.f32 %v1873, %v1922
        %v1970 = vmul.f32 %v1874, %v1926
        %v1971 = vmul.f32 %v1875, %v1926
        %v1972 = vmul.f32 %v1876, %v1930
        %v1973 = vmul.f32 %v1877, %v1930
        %v1974 = vmul.f32 %v1878, %v1934
        %v1975 = vmul.f32 %v1879, %v1934
        %v1976 = vmul.f32 %v1880, %v1938
        %v1977 = vmul.f32 %v1881, %v1938
        %v1978 = vmul.f32 %v1882, %v1942
        %v1979 = vmul.f32 %v1883, %v1942
        %v1980 = vmul.f32 %v1884, %v1946
        %v1981 = vmul.f32 %v1885, %v1946
        %v1982 = vmul.f32 %v1886, %v1950
        %v1983 = vmul.f32 %v1887, %v1950
        %v1984 = vadd.f32 %v1952, %v1954
        %v1985 = vadd.f32 %v1984, %v1956
        %v1986 = vadd.f32 %v1985, %v1958
        %v1987 = vadd.f32 %v1986, %v1960
        %v1988 = vadd.f32 %v1987, %v1962
        %v1989 = vadd.f32 %v1988, %v1964
        %v1990 = vadd.f32 %v1989, %v1966
        %v1991 = vadd.f32 %v1990, %v1968
        %v1992 = vadd.f32 %v1991, %v1970
        %v1993 = vadd.f32 %v1992, %v1972
        %v1994 = vadd.f32 %v1993, %v1974
        %v1995 = vadd.f32 %v1994, %v1976
        %v1996 = vadd.f32 %v1995, %v1978
        %v1997 = vadd.f32 %v1996, %v1980
        %v1998 = vadd.f32 %v1997, %v1982
        %v1999 = vrot.slane %v1998, 4
        %v2000 = vadd.f32 %v1998, %v1999
        %v2001 = vrot.slane %v2000, 2
        %v2002 = vadd.f32 %v2000, %v2001
        %v2003 = vrot.slane %v2002, 1
        %v2004 = vadd.f32 %v2002, %v2003
        %v2005 = vadd.f32 %v1953, %v1955
        %v2006 = vadd.f32 %v2005, %v1957
        %v2007 = vadd.f32 %v2006, %v1959
        %v2008 = vadd.f32 %v2007, %v1961
        %v2009 = vadd.f32 %v2008, %v1963
        %v2010 = vadd.f32 %v2009, %v1965
        %v2011 = vadd.f32 %v2010, %v1967
        %v2012 = vadd.f32 %v2011, %v1969
        %v2013 = vadd.f32 %v2012, %v1971
        %v2014 = vadd.f32 %v2013, %v1973
        %v2015 = vadd.f32 %v2014, %v1975
        %v2016 = vadd.f32 %v2015, %v1977
        %v2017 = vadd.f32 %v2016, %v1979
        %v2018 = vadd.f32 %v2017, %v1981
        %v2019 = vadd.f32 %v2018, %v1983
        %v2020 = vrot.slane %v2019, 4
        %v2021 = vadd.f32 %v2019, %v2020
        %v2022 = vrot.slane %v2021, 2
        %v2023 = vadd.f32 %v2021, %v2022
        %v2024 = vrot.slane %v2023, 1
        %v2025 = vadd.f32 %v2023, %v2024
        %v2026 = vadd.f32 %v1596, %v2004
        %v2027 = vadd.f32 %v1597, %v2025
        %s2028 = sld [smem:[#allocation2]]
        %v2029 = vstv %s2028
        %v2030 = vadd.f32 %v2026, %v2029
        %v2031 = vadd.f32 %v2027, %v2029
        %v2034 = vrot.slane %v2031, 7
        %vm2035 = vcmask 1040384
        %v2036 = vsel %vm2035, %v2030, %v2034
        %v2038 = vlaneseq
        %vm2039 = vcmp.ge.s32.totalorder %v2038, 0
        %vm2040 = vcmp.lt.s32.totalorder %v2038, 256
        %vm2041 = vmand %vm2039, %vm2040
        %2042 = vst.msk [vmem:[%s216] sm:$0x3] %vm2041, %v2036
        %s2043 = sand.u32 %s132, 1
        %s2044 = scalar_lea.sflag [#allocation4], %s2043
        %s2045 = sand.u32 %s132, 1
        %s2046 = smul.addr %s2045, 2
        %s2047 = scalar_lea.vmem [#allocation3], %s2046
        // Predicated region
        $region37: #{tpu_custom_call.1} parent=35 // pred_check
          %p2048 = pneg %p142
        $region38: #{tpu_custom_call.1} parent=35 // pred_check_branch
          %2050 = sbr.rel (%p2048) target = $region40
        $region39: #{tpu_custom_call.1} parent=35 // pred_region
          %s2051 = smul.u32 2, %s24
          %2053 = vsyncadd %s2044, 0
          %s2054 = smul.addr %s23, 2
          %s2055 = sadd.s32 %s2051, %s2054
          %s2056 = scalar_lea.hbm %s4, %s2055
          %s2058 = sshll.u32 %s2047, 4
          %s2059 = int_to_ptr.vmem [resolvable:$true] %s2058
          %s2060 = sshll.u32 %s2056, 4
          %s2061 = int_to_ptr.hbm [resolvable:$true] %s2060
          %2063 = dma.vmem_to_hbm [thread:$0]  %s2059, 32, %s2061, %s2044
        $region40: #{tpu_custom_call.1} parent=35 // pred_fallthru
          _
      $region36: #{tpu_custom_call.1} parent=5 // pred_fallthru
        _
      %p2064 = scmp.le.s32.totalorder 2, %s14
      // Predicated region
      $region41: #{tpu_custom_call.1} parent=5 // pred_check
        %p2065 = pneg %p2064
      $region42: #{tpu_custom_call.1} parent=5 // pred_check_branch
        %2067 = sbr.rel (%p2065) target = $region44
      $region43: #{tpu_custom_call.1} parent=5 // pred_region
        %s2068 = ssub.s32 %s14, 2
        // Predicated region
        $region45: #{tpu_custom_call.1} parent=43 // pred_check
          %p2069 = pneg %p148
        $region46: #{tpu_custom_call.1} parent=43 // pred_check_branch
          %2071 = sbr.rel (%p2069) target = $region48
        $region47: #{tpu_custom_call.1} parent=43 // pred_region
          %s2072 = sand.u32 %s133, 1
          %s2073 = scalar_lea.sflag [#allocation4], %s2072
          %s2074 = sand.u32 %s133, 1
          %s2075 = smul.addr %s2074, 2
          %s2076 = scalar_lea.vmem [#allocation3], %s2075
          %2078 = dma.done %s2073, 32
        $region48: #{tpu_custom_call.1} parent=43 // pred_fallthru
          _
      $region44: #{tpu_custom_call.1} parent=5 // pred_fallthru
        _
    $region6: #{tpu_custom_call.1} parent=1 // loop_footer
      %s18 = sadd.s32 1, %s14
    $region7: #{tpu_custom_call.1} parent=1 // loop_footer_branch
      %13 = sbr.rel target = $region3
    $region8: #{tpu_custom_call.1} parent=1 // loop_exit
      _
    %2079 = vsyncpa [#allocation4], 1
    %s2080 = scalar_lea.sflag [#allocation4], 1
    %2081 = vsyncpa %s2080, 1

</llo_original>
